<compile_context>
chip_gen: v5e
topology: v5e:2x2
jax: 0.10.0
libtpu: 0.0.40
codegen_flags: <defaults>
</compile_context>

<pallas_src>
import functools

import jax
import jax.numpy as jnp
from jax.experimental import pallas as pl
from jax.experimental.pallas import tpu as pltpu


# ----------------------------------------------------------------------------
# Kernels
# ----------------------------------------------------------------------------
def _expert_kernel(x_ref, w_ref, b_ref, o_ref):
    """One (tm, tn) output tile: full-K MXU matmul + f32 bias add, one step."""
    acc = jnp.dot(x_ref[...], w_ref[...], preferred_element_type=jnp.float32)
    o_ref[...] = (acc + b_ref[...]).astype(o_ref.dtype)


def _batched_expert_kernel(x_ref, w_ref, b_ref, o_ref):
    """One expert per grid step: (1, M, K) x (1, K, N) -> (1, M, N)."""
    acc = jnp.dot(x_ref[0], w_ref[0], preferred_element_type=jnp.float32)
    o_ref[0] = (acc + b_ref[0]).astype(o_ref.dtype)


# ----------------------------------------------------------------------------
# Parameter prep (do ONCE at load time, not per forward)
# ----------------------------------------------------------------------------
def init_expert_params(w, b, *, param_dtype=jnp.bfloat16):
    """Cast + pre-transpose the nn.Linear weight once at parameter-load time.

    w : (out_features, in_features)   PyTorch nn.Linear weight layout
    b : (out_features,)
    Returns (w_t, b_f32): w_t is (in_features, out_features) in `param_dtype`
    (bf16 by default: MXU-native, halves the weight DMA), bias stays f32.
    """
    w_t = jnp.asarray(jnp.asarray(w).T, dtype=param_dtype)
    return w_t, jnp.asarray(b, dtype=jnp.float32)


def _num_tensorcores_per_chip():
    """2 for megacore chips (v7x, v4, v5p); 1 for v5e / v6e; 1 on failure."""
    try:
        kind = jax.devices()[0].device_kind.lower()
    except Exception:  # pragma: no cover - defensive
        return 1
    return 2 if ("v7" in kind or "v4" in kind or "v5p" in kind) else 1


# ----------------------------------------------------------------------------
# Single-expert forward
# ----------------------------------------------------------------------------
@functools.partial(jax.jit, static_argnames=("n_blocks", "out_dtype"))
def _expert_call(x2d, w_t, b2d, *, n_blocks, out_dtype):
    M, K = x2d.shape
    _, N = w_t.shape
    assert N % n_blocks == 0, "N must divide evenly into N blocks"
    tn = N // n_blocks
    assert tn % 128 == 0, "N tile must stay lane-dense (multiple of 128)"

    # --- M tiling guard: don't let huge token counts blow VMEM -------------
    TM_MAX = 512
    if M <= TM_MAX:
        tm, m_blocks, m_pad = M, 1, M
    else:
        tm = TM_MAX
        m_blocks = -(-M // tm)
        m_pad = m_blocks * tm
        if m_pad != M:
            x2d = jnp.pad(x2d, ((0, m_pad - M), (0, 0)))

    # --- VMEM guard: full-K weight slab is double-buffered -----------------
    vmem_bytes = (
        2 * K * tn * w_t.dtype.itemsize          # weight slabs (double buffer)
        + 2 * tm * K * x2d.dtype.itemsize        # x blocks
        + 2 * tn * 4                             # bias (f32)
        + 2 * tm * tn * jnp.dtype(out_dtype).itemsize  # output blocks
    )
    assert vmem_bytes < 24 * 1024 * 1024, (
        "full-K weight slab exceeds VMEM budget; reintroduce a K reduction "
        "grid axis with an f32 accumulator for these shapes")

    out = pl.pallas_call(
        _expert_kernel,
        out_shape=jax.ShapeDtypeStruct((m_pad, N), out_dtype),
        grid_spec=pltpu.PrefetchScalarGridSpec(
            num_scalar_prefetch=0,
            grid=(m_blocks, n_blocks),
            in_specs=[
                pl.BlockSpec((tm, K), lambda i, j: (i, 0)),   # activations
                pl.BlockSpec((K, tn), lambda i, j: (0, j)),   # weight slab
                pl.BlockSpec((1, tn), lambda i, j: (0, j)),   # bias (f32)
            ],
            out_specs=pl.BlockSpec((tm, tn), lambda i, j: (i, j)),
        ),
        compiler_params=pltpu.CompilerParams(
            # Only matters when a grid axis is >= 2 wide (megacore chips).
            dimension_semantics=("parallel", "parallel"),
            vmem_limit_bytes=32 * 1024 * 1024,
        ),
    )(x2d, w_t, b2d)

    if m_pad != M:
        out = out[:M]
    return out


def expert_forward(x, w_t, b, *, n_blocks=None, out_dtype=None):
    """Linear forward: y = x @ w_t + b (f32 accumulate on the MXU).

    x   : (..., K)  activations (f32 or bf16; bf16 recommended)
    w_t : (K, N)    pre-transposed weight from `init_expert_params`
    b   : (N,)      bias
    out_dtype defaults to x.dtype.
    """
    *lead, K = x.shape
    K2, N = w_t.shape
    assert K == K2 and b.shape == (N,)

    if out_dtype is None:
        out_dtype = x.dtype
    if n_blocks is None:
        # Single grid step on 1-TC chips (v5e/v6e); 2-wide split on megacore.
        n_blocks = 2 if _num_tensorcores_per_chip() >= 2 else 1

    x2d = x.reshape(-1, K)
    b2d = b.reshape(1, N).astype(jnp.float32)
    out = _expert_call(x2d, w_t, b2d, n_blocks=n_blocks, out_dtype=out_dtype)
    return out.reshape(*lead, N)


# ----------------------------------------------------------------------------
# Batched multi-expert forward: E experts in ONE pallas_call (amortizes the
# per-call launch/prologue overhead that dominates at these tiny sizes).
# ----------------------------------------------------------------------------
@functools.partial(jax.jit, static_argnames=("out_dtype",))
def batched_experts_forward(x, w_t, b, *, out_dtype=None):
    """x: (E, M, K), w_t: (E, K, N), b: (E, N) -> (E, M, N)."""
    E, M, K = x.shape
    E2, K2, N = w_t.shape
    assert E == E2 and K == K2 and b.shape == (E, N)
    if out_dtype is None:
        out_dtype = x.dtype
    b3d = b.reshape(E, 1, N).astype(jnp.float32)

    return pl.pallas_call(
        _batched_expert_kernel,
        out_shape=jax.ShapeDtypeStruct((E, M, N), out_dtype),
        grid_spec=pltpu.PrefetchScalarGridSpec(
            num_scalar_prefetch=0,
            grid=(E,),
            in_specs=[
                pl.BlockSpec((1, M, K), lambda e: (e, 0, 0)),
                pl.BlockSpec((1, K, N), lambda e: (e, 0, 0)),
                pl.BlockSpec((1, 1, N), lambda e: (e, 0, 0)),
            ],
            out_specs=pl.BlockSpec((1, M, N), lambda e: (e, 0, 0)),
        ),
        compiler_params=pltpu.CompilerParams(
            dimension_semantics=("parallel",),
            vmem_limit_bytes=32 * 1024 * 1024,
        ),
    )(x, w_t, b3d)


# ----------------------------------------------------------------------------
# Demo / correctness check
# ----------------------------------------------------------------------------
if __name__ == "__main__":
    # Module defaults: in_features=512, out_features=1024; small token batch.
    batch = 8
    in_features = 512
    out_features = 1024

    key = jax.random.PRNGKey(0)
    kx, kw, kb = jax.random.split(key, 3)

    x = jax.random.normal(kx, (batch, in_features), dtype=jnp.float32)
    # PyTorch nn.Linear layout: W (out, in), b (out,)
    w = jax.random.normal(kw, (out_features, in_features), dtype=jnp.float32) * 0.02
    b = jax.random.normal(kb, (out_features,), dtype=jnp.float32) * 0.02

    ref = x @ w.T + b  # nn.Linear reference (f32)

    # ---- default (recommended) path: bf16 params + activations -------------
    # Weight cast + transpose happen ONCE here, not per forward call.
    w_t_bf16, b_f32 = init_expert_params(w, b)                 # bf16 (K, N)
    y_bf = expert_forward(x.astype(jnp.bfloat16), w_t_bf16, b_f32)
    jax.block_until_ready(y_bf)
    assert y_bf.shape == (batch, out_features)
    assert jnp.allclose(y_bf.astype(jnp.float32), ref, atol=3e-2, rtol=3e-2), \
        "bf16-default path mismatch"

    # ---- exact nn.Linear semantics path (f32 everywhere) -------------------
    w_t_f32, _ = init_expert_params(w, b, param_dtype=jnp.float32)
    y_f32 = expert_forward(x, w_t_f32, b_f32)
    jax.block_until_ready(y_f32)
    assert jnp.allclose(y_f32, ref, atol=1e-3, rtol=1e-3), "f32 path mismatch"

    # ---- batched experts: amortize launch overhead across E experts --------
    E = 4
    ke = jax.random.split(jax.random.PRNGKey(1), 2 * E)
    w_stack = jnp.stack([jax.random.normal(ke[i], (out_features, in_features),
                                           dtype=jnp.float32) * 0.02
                         for i in range(E)])
    b_stack = jnp.stack([jax.random.normal(ke[E + i], (out_features,),
                                           dtype=jnp.float32) * 0.02
                         for i in range(E)])
    x_stack = jnp.stack([x] * E)

    w_t_stack = jnp.transpose(w_stack, (0, 2, 1)).astype(jnp.bfloat16)  # once
    y_stack = batched_experts_forward(x_stack.astype(jnp.bfloat16),
                                      w_t_stack, b_stack)
    jax.block_until_ready(y_stack)
    ref_stack = jnp.einsum("emk,enk->emn", x_stack, w_stack) + b_stack[:, None, :]
    assert jnp.allclose(y_stack.astype(jnp.float32), ref_stack,
                        atol=3e-2, rtol=3e-2), "batched experts mismatch"

    print("KERNEL_OK")
</pallas_src>

<mosaic_0001>
module attributes {stable_mosaic.version = 11 : i64} {
  func.func @_expert_kernel(%arg0: i32, %arg1: i32, %arg2: memref<8x512xbf16, #tpu.memory_space<vmem>>, %arg3: memref<512x1024xbf16, #tpu.memory_space<vmem>>, %arg4: memref<1x1024xf32, #tpu.memory_space<vmem>>, %arg5: memref<8x1024xbf16, #tpu.memory_space<vmem>>) attributes {dimension_semantics = [#tpu.dimension_semantics<parallel>, #tpu.dimension_semantics<parallel>], iteration_bounds = array<i64: 1, 1>, scalar_prefetch = 0 : i64, scratch_operands = 0 : i64, tpu.core_type = #tpu.core_type<tc>, window_params = [{transform_indices = @transform_0, window_bounds = array<i64: 8, 512>}, {transform_indices = @transform_1, window_bounds = array<i64: 512, 1024>}, {transform_indices = @transform_2, window_bounds = array<i64: 1, 1024>}, {transform_indices = @transform_3, window_bounds = array<i64: 8, 1024>}]} {
    %c0 = arith.constant 0 : index
    %c0_0 = arith.constant 0 : index
    %0 = vector.load %arg2[%c0, %c0_0] : memref<8x512xbf16, #tpu.memory_space<vmem>>, vector<8x512xbf16>
    %c0_1 = arith.constant 0 : index
    %c0_2 = arith.constant 0 : index
    %1 = vector.load %arg3[%c0_1, %c0_2] : memref<512x1024xbf16, #tpu.memory_space<vmem>>, vector<512x1024xbf16>
    %cst = arith.constant dense<0.000000e+00> : vector<8x1024xf32>
    %2 = tpu.matmul %0, %1, %cst {dimension_numbers = #tpu.dot_dimension_numbers<[1], [0], [0], [1], [0, 0, 1, 1], [], []>} : vector<8x512xbf16>, vector<512x1024xbf16>, vector<8x1024xf32> -> vector<8x1024xf32>
    %c0_3 = arith.constant 0 : index
    %c0_4 = arith.constant 0 : index
    %3 = vector.load %arg4[%c0_3, %c0_4] : memref<1x1024xf32, #tpu.memory_space<vmem>>, vector<1x1024xf32>
    %4 = vector.broadcast %3 : vector<1x1024xf32> to vector<8x1024xf32>
    %5 = arith.addf %2, %4 : vector<8x1024xf32>
    %6 = arith.truncf %5 : vector<8x1024xf32> to vector<8x1024xbf16>
    %c0_5 = arith.constant 0 : index
    %c0_6 = arith.constant 0 : index
    %7 = vector.load %arg5[%c0_5, %c0_6] : memref<8x1024xbf16, #tpu.memory_space<vmem>>, vector<8x1024xbf16>
    tpu.vector_store %arg5[%c0_5, %c0_6], %6 {strides = array<i32>} : memref<8x1024xbf16, #tpu.memory_space<vmem>>, vector<8x1024xbf16>,
    return
  }
  func.func @transform_0(%arg0: i32, %arg1: i32) -> (i32, i32) {
    %c0_i32 = arith.constant 0 : i32
    %c0_i32_0 = arith.constant 0 : i32
    return %arg0, %c0_i32 : i32, i32
  }
  func.func @transform_1(%arg0: i32, %arg1: i32) -> (i32, i32) {
    %c0_i32 = arith.constant 0 : i32
    %c0_i32_0 = arith.constant 0 : i32
    return %c0_i32, %arg1 : i32, i32
  }
  func.func @transform_2(%arg0: i32, %arg1: i32) -> (i32, i32) {
    %c0_i32 = arith.constant 0 : i32
    %c0_i32_0 = arith.constant 0 : i32
    return %c0_i32, %arg1 : i32, i32
  }
  func.func @transform_3(%arg0: i32, %arg1: i32) -> (i32, i32) {
    %c0_i32 = arith.constant 0 : i32
    return %arg0, %arg1 : i32, i32
  }
}

</mosaic_0001>

<llo_original>
// kernel: _expert_call.1
$region0: #{_expert_call.1}
  #allocation0 [shape = 'u32[]', space=smem, size = 0x4, offset = 0x4, fixed_abs, tag = 'smem constant byte address 0x4 - core index']
  #allocation1 [shape = 'u32[72,128]{1,0:T(1,128)}', space=vmem, size = 0x9000, scoped, tag = 'internal scratch']
  %s0 = inlined_call_operand.hbm [shape: bf16[8,512], index: 0, kind: input, shape index: {}]
  %s1 = inlined_call_operand.hbm [shape: bf16[512,1024], index: 1, kind: input, shape index: {}]
  %s2 = inlined_call_operand.hbm [shape: f32[1,1024], index: 2, kind: input, shape index: {}]
  %s3 = inlined_call_operand.hbm [shape: bf16[8,1024], index: 3, kind: output, shape index: {}]
  %s4 = sld [smem:[#allocation0]]
  $region34: #{_expert_call.1} parent=0
    _
  %s6 = ssub.s32 1, %s4
  %s7 = scalar_select 0, %s6, %s4
  $region1: #{_expert_call.1} parent=0
    #allocation2 [shape = 'u8[8192]{0}', space=vmem, size = 0x2000, scoped, tag = 'input window, operand 0, single buffered']
    #allocation3 [shape = 's32[1]{0}', space=sflag, size = 0x4, scoped, tag = 'scoped memory for _expert_call.1']
    #allocation4 [shape = 's32[1]{0}', space=sflag, size = 0x4, scoped, tag = 'scoped memory for _expert_call.1']
    #allocation5 [shape = 'u8[1048576]{0}', space=vmem, size = 0x100000, scoped, tag = 'input window, operand 1, single buffered']
    #allocation6 [shape = 's32[1]{0}', space=sflag, size = 0x4, scoped, tag = 'scoped memory for _expert_call.1']
    #allocation7 [shape = 'u8[4096]{0}', space=vmem, size = 0x1000, scoped, tag = 'input window, operand 2, single buffered']
    #allocation8 [shape = 'u8[16384]{0}', space=vmem, size = 0x4000, scoped, tag = 'output window, operand 0, single buffered']
    %8 = vsyncpa [#allocation3], 0
    %9 = vsyncpa [#allocation6], 0
    %10 = vsyncpa [#allocation4], 0
    // Predicated region
    $region2: #{_expert_call.1} parent=1 // pred_check
      _
    $region3: #{_expert_call.1} parent=1 // pred_check_branch
      %12 = sbr.rel (0) target = $region5
    $region4: #{_expert_call.1} parent=1 // pred_region
      %14 = vsyncadd [#allocation3], 0
      %s16 = sshll.u32 %s0, 4
      %s17 = int_to_ptr.hbm [resolvable:$true] %s16
      %s18 = sshll.u32 [#allocation2], 4
      %s19 = int_to_ptr.vmem [resolvable:$true] %s18
      %21 = dma.hbm_to_vmem [thread:$0]  %s17, 256, %s19, [#allocation3]
    $region5: #{_expert_call.1} parent=1 // pred_fallthru
      _
    // Predicated region
    $region6: #{_expert_call.1} parent=1 // pred_check
      _
    $region7: #{_expert_call.1} parent=1 // pred_check_branch
      %23 = sbr.rel (0) target = $region9
    $region8: #{_expert_call.1} parent=1 // pred_region
      %25 = vsyncadd [#allocation6], 0
      %s26 = sshll.u32 %s1, 4
      %s27 = int_to_ptr.hbm [resolvable:$true] %s26
      %s28 = sshll.u32 [#allocation5], 4
      %s29 = int_to_ptr.vmem [resolvable:$true] %s28
      %34 = dma.hbm_to_vmem [thread:$0]  %s27, 32768, %s29, [#allocation6], 512, 512, 32
    $region9: #{_expert_call.1} parent=1 // pred_fallthru
      _
    // Predicated region
    $region10: #{_expert_call.1} parent=1 // pred_check
      _
    $region11: #{_expert_call.1} parent=1 // pred_check_branch
      %36 = sbr.rel (0) target = $region13
    $region12: #{_expert_call.1} parent=1 // pred_region
      %38 = vsyncadd [#allocation6], 0
      %s40 = sshll.u32 %s2, 4
      %s41 = int_to_ptr.hbm [resolvable:$true] %s40
      %s42 = sshll.u32 [#allocation7], 4
      %s43 = int_to_ptr.vmem [resolvable:$true] %s42
      %45 = dma.hbm_to_vmem [thread:$0]  %s41, 128, %s43, [#allocation6]
    $region13: #{_expert_call.1} parent=1 // pred_fallthru
      _
    // Predicated region
    $region14: #{_expert_call.1} parent=1 // pred_check
      _
    $region15: #{_expert_call.1} parent=1 // pred_check_branch
      %47 = sbr.rel (0) target = $region17
    $region16: #{_expert_call.1} parent=1 // pred_region
      %49 = dma.done [#allocation3], 256
    $region17: #{_expert_call.1} parent=1 // pred_fallthru
      _
    // Predicated region
    $region18: #{_expert_call.1} parent=1 // pred_check
      _
    $region19: #{_expert_call.1} parent=1 // pred_check_branch
      %51 = sbr.rel (0) target = $region21
    $region20: #{_expert_call.1} parent=1 // pred_region
      %53 = dma.done [#allocation6], 32768
    $region21: #{_expert_call.1} parent=1 // pred_fallthru
      _
    // Predicated region
    $region22: #{_expert_call.1} parent=1 // pred_check
      _
    $region23: #{_expert_call.1} parent=1 // pred_check_branch
      %55 = sbr.rel (0) target = $region25
    $region24: #{_expert_call.1} parent=1 // pred_region
      %57 = dma.done [#allocation6], 128
    $region25: #{_expert_call.1} parent=1 // pred_fallthru
      _
    %v58 = vld [vmem:[#allocation2] sm:$0xff]
    %v59 = vld [vmem:[#allocation2 + $0x8] sm:$0xff]
    %v60 = vld [vmem:[#allocation5] sm:$0xff]
    %v61 = vld [vmem:[#allocation5 + $0x8] sm:$0xff]
    %v62 = vld [vmem:[#allocation5 + $0x10] sm:$0xff]
    %v63 = vld [vmem:[#allocation5 + $0x18] sm:$0xff]
    %v64 = vld [vmem:[#allocation5 + $0x20] sm:$0xff]
    %v65 = vld [vmem:[#allocation5 + $0x28] sm:$0xff]
    %v66 = vld [vmem:[#allocation5 + $0x30] sm:$0xff]
    %v67 = vld [vmem:[#allocation5 + $0x38] sm:$0xff]
    %v68 = vld [vmem:[#allocation5 + $0x40] sm:$0xff]
    %v69 = vld [vmem:[#allocation5 + $0x48] sm:$0xff]
    %v70 = vld [vmem:[#allocation5 + $0x50] sm:$0xff]
    %v71 = vld [vmem:[#allocation5 + $0x58] sm:$0xff]
    %v72 = vld [vmem:[#allocation5 + $0x60] sm:$0xff]
    %v73 = vld [vmem:[#allocation5 + $0x68] sm:$0xff]
    %v74 = vld [vmem:[#allocation5 + $0x70] sm:$0xff]
    %v75 = vld [vmem:[#allocation5 + $0x78] sm:$0xff]
    %v76 = vld [vmem:[#allocation5 + $0x80] sm:$0xff]
    %v77 = vld [vmem:[#allocation5 + $0x88] sm:$0xff]
    %v78 = vld [vmem:[#allocation5 + $0x90] sm:$0xff]
    %v79 = vld [vmem:[#allocation5 + $0x98] sm:$0xff]
    %v80 = vld [vmem:[#allocation5 + $0xa0] sm:$0xff]
    %v81 = vld [vmem:[#allocation5 + $0xa8] sm:$0xff]
    %v82 = vld [vmem:[#allocation5 + $0xb0] sm:$0xff]
    %v83 = vld [vmem:[#allocation5 + $0xb8] sm:$0xff]
    %v84 = vld [vmem:[#allocation5 + $0xc0] sm:$0xff]
    %v85 = vld [vmem:[#allocation5 + $0xc8] sm:$0xff]
    %v86 = vld [vmem:[#allocation5 + $0xd0] sm:$0xff]
    %v87 = vld [vmem:[#allocation5 + $0xd8] sm:$0xff]
    %v88 = vld [vmem:[#allocation5 + $0xe0] sm:$0xff]
    %v89 = vld [vmem:[#allocation5 + $0xe8] sm:$0xff]
    %v90 = vld [vmem:[#allocation5 + $0xf0] sm:$0xff]
    %v91 = vld [vmem:[#allocation5 + $0xf8] sm:$0xff]
    %v92 = vld [vmem:[#allocation5 + $0x100] sm:$0xff]
    %v93 = vld [vmem:[#allocation5 + $0x108] sm:$0xff]
    %v94 = vld [vmem:[#allocation5 + $0x110] sm:$0xff]
    %v95 = vld [vmem:[#allocation5 + $0x118] sm:$0xff]
    %v96 = vld [vmem:[#allocation5 + $0x120] sm:$0xff]
    %v97 = vld [vmem:[#allocation5 + $0x128] sm:$0xff]
    %v98 = vld [vmem:[#allocation5 + $0x130] sm:$0xff]
    %v99 = vld [vmem:[#allocation5 + $0x138] sm:$0xff]
    %v100 = vld [vmem:[#allocation5 + $0x140] sm:$0xff]
    %v101 = vld [vmem:[#allocation5 + $0x148] sm:$0xff]
    %v102 = vld [vmem:[#allocation5 + $0x150] sm:$0xff]
    %v103 = vld [vmem:[#allocation5 + $0x158] sm:$0xff]
    %v104 = vld [vmem:[#allocation5 + $0x160] sm:$0xff]
    %v105 = vld [vmem:[#allocation5 + $0x168] sm:$0xff]
    %v106 = vld [vmem:[#allocation5 + $0x170] sm:$0xff]
    %v107 = vld [vmem:[#allocation5 + $0x178] sm:$0xff]
    %v108 = vld [vmem:[#allocation5 + $0x180] sm:$0xff]
    %v109 = vld [vmem:[#allocation5 + $0x188] sm:$0xff]
    %v110 = vld [vmem:[#allocation5 + $0x190] sm:$0xff]
    %v111 = vld [vmem:[#allocation5 + $0x198] sm:$0xff]
    %v112 = vld [vmem:[#allocation5 + $0x1a0] sm:$0xff]
    %v113 = vld [vmem:[#allocation5 + $0x1a8] sm:$0xff]
    %v114 = vld [vmem:[#allocation5 + $0x1b0] sm:$0xff]
    %v115 = vld [vmem:[#allocation5 + $0x1b8] sm:$0xff]
    %v116 = vld [vmem:[#allocation5 + $0x1c0] sm:$0xff]
    %v117 = vld [vmem:[#allocation5 + $0x1c8] sm:$0xff]
    %v118 = vld [vmem:[#allocation5 + $0x1d0] sm:$0xff]
    %v119 = vld [vmem:[#allocation5 + $0x1d8] sm:$0xff]
    %v120 = vld [vmem:[#allocation5 + $0x1e0] sm:$0xff]
    %v121 = vld [vmem:[#allocation5 + $0x1e8] sm:$0xff]
    %v122 = vld [vmem:[#allocation5 + $0x1f0] sm:$0xff]
    %v123 = vld [vmem:[#allocation5 + $0x1f8] sm:$0xff]
    %v124 = vld [vmem:[#allocation5 + $0x200] sm:$0xff]
    %v125 = vld [vmem:[#allocation5 + $0x208] sm:$0xff]
    %v126 = vld [vmem:[#allocation5 + $0x210] sm:$0xff]
    %v127 = vld [vmem:[#allocation5 + $0x218] sm:$0xff]
    %v128 = vld [vmem:[#allocation5 + $0x220] sm:$0xff]
    %v129 = vld [vmem:[#allocation5 + $0x228] sm:$0xff]
    %v130 = vld [vmem:[#allocation5 + $0x230] sm:$0xff]
    %v131 = vld [vmem:[#allocation5 + $0x238] sm:$0xff]
    %v132 = vld [vmem:[#allocation5 + $0x240] sm:$0xff]
    %v133 = vld [vmem:[#allocation5 + $0x248] sm:$0xff]
    %v134 = vld [vmem:[#allocation5 + $0x250] sm:$0xff]
    %v135 = vld [vmem:[#allocation5 + $0x258] sm:$0xff]
    %v136 = vld [vmem:[#allocation5 + $0x260] sm:$0xff]
    %v137 = vld [vmem:[#allocation5 + $0x268] sm:$0xff]
    %v138 = vld [vmem:[#allocation5 + $0x270] sm:$0xff]
    %v139 = vld [vmem:[#allocation5 + $0x278] sm:$0xff]
    %v140 = vld [vmem:[#allocation5 + $0x280] sm:$0xff]
    %v141 = vld [vmem:[#allocation5 + $0x288] sm:$0xff]
    %v142 = vld [vmem:[#allocation5 + $0x290] sm:$0xff]
    %v143 = vld [vmem:[#allocation5 + $0x298] sm:$0xff]
    %v144 = vld [vmem:[#allocation5 + $0x2a0] sm:$0xff]
    %v145 = vld [vmem:[#allocation5 + $0x2a8] sm:$0xff]
    %v146 = vld [vmem:[#allocation5 + $0x2b0] sm:$0xff]
    %v147 = vld [vmem:[#allocation5 + $0x2b8] sm:$0xff]
    %v148 = vld [vmem:[#allocation5 + $0x2c0] sm:$0xff]
    %v149 = vld [vmem:[#allocation5 + $0x2c8] sm:$0xff]
    %v150 = vld [vmem:[#allocation5 + $0x2d0] sm:$0xff]
    %v151 = vld [vmem:[#allocation5 + $0x2d8] sm:$0xff]
    %v152 = vld [vmem:[#allocation5 + $0x2e0] sm:$0xff]
    %v153 = vld [vmem:[#allocation5 + $0x2e8] sm:$0xff]
    %v154 = vld [vmem:[#allocation5 + $0x2f0] sm:$0xff]
    %v155 = vld [vmem:[#allocation5 + $0x2f8] sm:$0xff]
    %v156 = vld [vmem:[#allocation5 + $0x300] sm:$0xff]
    %v157 = vld [vmem:[#allocation5 + $0x308] sm:$0xff]
    %v158 = vld [vmem:[#allocation5 + $0x310] sm:$0xff]
    %v159 = vld [vmem:[#allocation5 + $0x318] sm:$0xff]
    %v160 = vld [vmem:[#allocation5 + $0x320] sm:$0xff]
    %v161 = vld [vmem:[#allocation5 + $0x328] sm:$0xff]
    %v162 = vld [vmem:[#allocation5 + $0x330] sm:$0xff]
    %v163 = vld [vmem:[#allocation5 + $0x338] sm:$0xff]
    %v164 = vld [vmem:[#allocation5 + $0x340] sm:$0xff]
    %v165 = vld [vmem:[#allocation5 + $0x348] sm:$0xff]
    %v166 = vld [vmem:[#allocation5 + $0x350] sm:$0xff]
    %v167 = vld [vmem:[#allocation5 + $0x358] sm:$0xff]
    %v168 = vld [vmem:[#allocation5 + $0x360] sm:$0xff]
    %v169 = vld [vmem:[#allocation5 + $0x368] sm:$0xff]
    %v170 = vld [vmem:[#allocation5 + $0x370] sm:$0xff]
    %v171 = vld [vmem:[#allocation5 + $0x378] sm:$0xff]
    %v172 = vld [vmem:[#allocation5 + $0x380] sm:$0xff]
    %v173 = vld [vmem:[#allocation5 + $0x388] sm:$0xff]
    %v174 = vld [vmem:[#allocation5 + $0x390] sm:$0xff]
    %v175 = vld [vmem:[#allocation5 + $0x398] sm:$0xff]
    %v176 = vld [vmem:[#allocation5 + $0x3a0] sm:$0xff]
    %v177 = vld [vmem:[#allocation5 + $0x3a8] sm:$0xff]
    %v178 = vld [vmem:[#allocation5 + $0x3b0] sm:$0xff]
    %v179 = vld [vmem:[#allocation5 + $0x3b8] sm:$0xff]
    %v180 = vld [vmem:[#allocation5 + $0x3c0] sm:$0xff]
    %v181 = vld [vmem:[#allocation5 + $0x3c8] sm:$0xff]
    %v182 = vld [vmem:[#allocation5 + $0x3d0] sm:$0xff]
    %v183 = vld [vmem:[#allocation5 + $0x3d8] sm:$0xff]
    %v184 = vld [vmem:[#allocation5 + $0x3e0] sm:$0xff]
    %v185 = vld [vmem:[#allocation5 + $0x3e8] sm:$0xff]
    %v186 = vld [vmem:[#allocation5 + $0x3f0] sm:$0xff]
    %v187 = vld [vmem:[#allocation5 + $0x3f8] sm:$0xff]
    %v188 = vld [vmem:[#allocation5 + $0x400] sm:$0xff]
    %v189 = vld [vmem:[#allocation5 + $0x408] sm:$0xff]
    %v190 = vld [vmem:[#allocation5 + $0x410] sm:$0xff]
    %v191 = vld [vmem:[#allocation5 + $0x418] sm:$0xff]
    %v192 = vld [vmem:[#allocation5 + $0x420] sm:$0xff]
    %v193 = vld [vmem:[#allocation5 + $0x428] sm:$0xff]
    %v194 = vld [vmem:[#allocation5 + $0x430] sm:$0xff]
    %v195 = vld [vmem:[#allocation5 + $0x438] sm:$0xff]
    %v196 = vld [vmem:[#allocation5 + $0x440] sm:$0xff]
    %v197 = vld [vmem:[#allocation5 + $0x448] sm:$0xff]
    %v198 = vld [vmem:[#allocation5 + $0x450] sm:$0xff]
    %v199 = vld [vmem:[#allocation5 + $0x458] sm:$0xff]
    %v200 = vld [vmem:[#allocation5 + $0x460] sm:$0xff]
    %v201 = vld [vmem:[#allocation5 + $0x468] sm:$0xff]
    %v202 = vld [vmem:[#allocation5 + $0x470] sm:$0xff]
    %v203 = vld [vmem:[#allocation5 + $0x478] sm:$0xff]
    %v204 = vld [vmem:[#allocation5 + $0x480] sm:$0xff]
    %v205 = vld [vmem:[#allocation5 + $0x488] sm:$0xff]
    %v206 = vld [vmem:[#allocation5 + $0x490] sm:$0xff]
    %v207 = vld [vmem:[#allocation5 + $0x498] sm:$0xff]
    %v208 = vld [vmem:[#allocation5 + $0x4a0] sm:$0xff]
    %v209 = vld [vmem:[#allocation5 + $0x4a8] sm:$0xff]
    %v210 = vld [vmem:[#allocation5 + $0x4b0] sm:$0xff]
    %v211 = vld [vmem:[#allocation5 + $0x4b8] sm:$0xff]
    %v212 = vld [vmem:[#allocation5 + $0x4c0] sm:$0xff]
    %v213 = vld [vmem:[#allocation5 + $0x4c8] sm:$0xff]
    %v214 = vld [vmem:[#allocation5 + $0x4d0] sm:$0xff]
    %v215 = vld [vmem:[#allocation5 + $0x4d8] sm:$0xff]
    %v216 = vld [vmem:[#allocation5 + $0x4e0] sm:$0xff]
    %v217 = vld [vmem:[#allocation5 + $0x4e8] sm:$0xff]
    %v218 = vld [vmem:[#allocation5 + $0x4f0] sm:$0xff]
    %v219 = vld [vmem:[#allocation5 + $0x4f8] sm:$0xff]
    %v220 = vld [vmem:[#allocation5 + $0x500] sm:$0xff]
    %v221 = vld [vmem:[#allocation5 + $0x508] sm:$0xff]
    %v222 = vld [vmem:[#allocation5 + $0x510] sm:$0xff]
    %v223 = vld [vmem:[#allocation5 + $0x518] sm:$0xff]
    %v224 = vld [vmem:[#allocation5 + $0x520] sm:$0xff]
    %v225 = vld [vmem:[#allocation5 + $0x528] sm:$0xff]
    %v226 = vld [vmem:[#allocation5 + $0x530] sm:$0xff]
    %v227 = vld [vmem:[#allocation5 + $0x538] sm:$0xff]
    %v228 = vld [vmem:[#allocation5 + $0x540] sm:$0xff]
    %v229 = vld [vmem:[#allocation5 + $0x548] sm:$0xff]
    %v230 = vld [vmem:[#allocation5 + $0x550] sm:$0xff]
    %v231 = vld [vmem:[#allocation5 + $0x558] sm:$0xff]
    %v232 = vld [vmem:[#allocation5 + $0x560] sm:$0xff]
    %v233 = vld [vmem:[#allocation5 + $0x568] sm:$0xff]
    %v234 = vld [vmem:[#allocation5 + $0x570] sm:$0xff]
    %v235 = vld [vmem:[#allocation5 + $0x578] sm:$0xff]
    %v236 = vld [vmem:[#allocation5 + $0x580] sm:$0xff]
    %v237 = vld [vmem:[#allocation5 + $0x588] sm:$0xff]
    %v238 = vld [vmem:[#allocation5 + $0x590] sm:$0xff]
    %v239 = vld [vmem:[#allocation5 + $0x598] sm:$0xff]
    %v240 = vld [vmem:[#allocation5 + $0x5a0] sm:$0xff]
    %v241 = vld [vmem:[#allocation5 + $0x5a8] sm:$0xff]
    %v242 = vld [vmem:[#allocation5 + $0x5b0] sm:$0xff]
    %v243 = vld [vmem:[#allocation5 + $0x5b8] sm:$0xff]
    %v244 = vld [vmem:[#allocation5 + $0x5c0] sm:$0xff]
    %v245 = vld [vmem:[#allocation5 + $0x5c8] sm:$0xff]
    %v246 = vld [vmem:[#allocation5 + $0x5d0] sm:$0xff]
    %v247 = vld [vmem:[#allocation5 + $0x5d8] sm:$0xff]
    %v248 = vld [vmem:[#allocation5 + $0x5e0] sm:$0xff]
    %v249 = vld [vmem:[#allocation5 + $0x5e8] sm:$0xff]
    %v250 = vld [vmem:[#allocation5 + $0x5f0] sm:$0xff]
    %v251 = vld [vmem:[#allocation5 + $0x5f8] sm:$0xff]
    %v252 = vld [vmem:[#allocation5 + $0x600] sm:$0xff]
    %v253 = vld [vmem:[#allocation5 + $0x608] sm:$0xff]
    %v254 = vld [vmem:[#allocation5 + $0x610] sm:$0xff]
    %v255 = vld [vmem:[#allocation5 + $0x618] sm:$0xff]
    %v256 = vld [vmem:[#allocation5 + $0x620] sm:$0xff]
    %v257 = vld [vmem:[#allocation5 + $0x628] sm:$0xff]
    %v258 = vld [vmem:[#allocation5 + $0x630] sm:$0xff]
    %v259 = vld [vmem:[#allocation5 + $0x638] sm:$0xff]
    %v260 = vld [vmem:[#allocation5 + $0x640] sm:$0xff]
    %v261 = vld [vmem:[#allocation5 + $0x648] sm:$0xff]
    %v262 = vld [vmem:[#allocation5 + $0x650] sm:$0xff]
    %v263 = vld [vmem:[#allocation5 + $0x658] sm:$0xff]
    %v264 = vld [vmem:[#allocation5 + $0x660] sm:$0xff]
    %v265 = vld [vmem:[#allocation5 + $0x668] sm:$0xff]
    %v266 = vld [vmem:[#allocation5 + $0x670] sm:$0xff]
    %v267 = vld [vmem:[#allocation5 + $0x678] sm:$0xff]
    %v268 = vld [vmem:[#allocation5 + $0x680] sm:$0xff]
    %v269 = vld [vmem:[#allocation5 + $0x688] sm:$0xff]
    %v270 = vld [vmem:[#allocation5 + $0x690] sm:$0xff]
    %v271 = vld [vmem:[#allocation5 + $0x698] sm:$0xff]
    %v272 = vld [vmem:[#allocation5 + $0x6a0] sm:$0xff]
    %v273 = vld [vmem:[#allocation5 + $0x6a8] sm:$0xff]
    %v274 = vld [vmem:[#allocation5 + $0x6b0] sm:$0xff]
    %v275 = vld [vmem:[#allocation5 + $0x6b8] sm:$0xff]
    %v276 = vld [vmem:[#allocation5 + $0x6c0] sm:$0xff]
    %v277 = vld [vmem:[#allocation5 + $0x6c8] sm:$0xff]
    %v278 = vld [vmem:[#allocation5 + $0x6d0] sm:$0xff]
    %v279 = vld [vmem:[#allocation5 + $0x6d8] sm:$0xff]
    %v280 = vld [vmem:[#allocation5 + $0x6e0] sm:$0xff]
    %v281 = vld [vmem:[#allocation5 + $0x6e8] sm:$0xff]
    %v282 = vld [vmem:[#allocation5 + $0x6f0] sm:$0xff]
    %v283 = vld [vmem:[#allocation5 + $0x6f8] sm:$0xff]
    %v284 = vld [vmem:[#allocation5 + $0x700] sm:$0xff]
    %v285 = vld [vmem:[#allocation5 + $0x708] sm:$0xff]
    %v286 = vld [vmem:[#allocation5 + $0x710] sm:$0xff]
    %v287 = vld [vmem:[#allocation5 + $0x718] sm:$0xff]
    %v288 = vld [vmem:[#allocation5 + $0x720] sm:$0xff]
    %v289 = vld [vmem:[#allocation5 + $0x728] sm:$0xff]
    %v290 = vld [vmem:[#allocation5 + $0x730] sm:$0xff]
    %v291 = vld [vmem:[#allocation5 + $0x738] sm:$0xff]
    %v292 = vld [vmem:[#allocation5 + $0x740] sm:$0xff]
    %v293 = vld [vmem:[#allocation5 + $0x748] sm:$0xff]
    %v294 = vld [vmem:[#allocation5 + $0x750] sm:$0xff]
    %v295 = vld [vmem:[#allocation5 + $0x758] sm:$0xff]
    %v296 = vld [vmem:[#allocation5 + $0x760] sm:$0xff]
    %v297 = vld [vmem:[#allocation5 + $0x768] sm:$0xff]
    %v298 = vld [vmem:[#allocation5 + $0x770] sm:$0xff]
    %v299 = vld [vmem:[#allocation5 + $0x778] sm:$0xff]
    %v300 = vld [vmem:[#allocation5 + $0x780] sm:$0xff]
    %v301 = vld [vmem:[#allocation5 + $0x788] sm:$0xff]
    %v302 = vld [vmem:[#allocation5 + $0x790] sm:$0xff]
    %v303 = vld [vmem:[#allocation5 + $0x798] sm:$0xff]
    %v304 = vld [vmem:[#allocation5 + $0x7a0] sm:$0xff]
    %v305 = vld [vmem:[#allocation5 + $0x7a8] sm:$0xff]
    %v306 = vld [vmem:[#allocation5 + $0x7b0] sm:$0xff]
    %v307 = vld [vmem:[#allocation5 + $0x7b8] sm:$0xff]
    %v308 = vld [vmem:[#allocation5 + $0x7c0] sm:$0xff]
    %v309 = vld [vmem:[#allocation5 + $0x7c8] sm:$0xff]
    %v310 = vld [vmem:[#allocation5 + $0x7d0] sm:$0xff]
    %v311 = vld [vmem:[#allocation5 + $0x7d8] sm:$0xff]
    %v312 = vld [vmem:[#allocation5 + $0x7e0] sm:$0xff]
    %v313 = vld [vmem:[#allocation5 + $0x7e8] sm:$0xff]
    %v314 = vld [vmem:[#allocation5 + $0x7f0] sm:$0xff]
    %v315 = vld [vmem:[#allocation5 + $0x7f8] sm:$0xff]
    %v316 = vld [vmem:[#allocation7] sm:$0xff]
    %v318 = vperm.slane %v316, 0
    %v319 = vperm.slane %v316, 1
    %v320 = vperm.slane %v316, 2
    %v321 = vperm.slane %v316, 3
    %v322 = vperm.slane %v316, 4
    %v323 = vperm.slane %v316, 5
    %v324 = vperm.slane %v316, 6
    %v325 = vperm.slane %v316, 7
    %v336 = vunpack.c.l.b16 %v58
    %v337 = vunpack.c.h.b16 %v58
    %v338 = vunpack.c.l.b16 %v59
    %v339 = vunpack.c.h.b16 %v59
    %v340 = vpack.c.b16 %v336, %v336
    %v341 = vpack.c.b16 %v337, %v337
    %v342 = vpack.c.b16 %v338, %v338
    %v343 = vpack.c.b16 %v339, %v339
    %v604 = vunpack.c.l.b16 %v60
    %v605 = vunpack.c.h.b16 %v60
    %v606 = vunpack.c.l.b16 %v61
    %v607 = vunpack.c.h.b16 %v61
    %v608 = vunpack.c.l.b16 %v62
    %v609 = vunpack.c.h.b16 %v62
    %v610 = vunpack.c.l.b16 %v63
    %v611 = vunpack.c.h.b16 %v63
    %v612 = vunpack.c.l.b16 %v64
    %v613 = vunpack.c.h.b16 %v64
    %v614 = vunpack.c.l.b16 %v65
    %v615 = vunpack.c.h.b16 %v65
    %v616 = vunpack.c.l.b16 %v66
    %v617 = vunpack.c.h.b16 %v66
    %v618 = vunpack.c.l.b16 %v67
    %v619 = vunpack.c.h.b16 %v67
    %v620 = vunpack.c.l.b16 %v68
    %v621 = vunpack.c.h.b16 %v68
    %v622 = vunpack.c.l.b16 %v69
    %v623 = vunpack.c.h.b16 %v69
    %v624 = vunpack.c.l.b16 %v70
    %v625 = vunpack.c.h.b16 %v70
    %v626 = vunpack.c.l.b16 %v71
    %v627 = vunpack.c.h.b16 %v71
    %v628 = vunpack.c.l.b16 %v72
    %v629 = vunpack.c.h.b16 %v72
    %v630 = vunpack.c.l.b16 %v73
    %v631 = vunpack.c.h.b16 %v73
    %v632 = vunpack.c.l.b16 %v74
    %v633 = vunpack.c.h.b16 %v74
    %v634 = vunpack.c.l.b16 %v75
    %v635 = vunpack.c.h.b16 %v75
    %v636 = vunpack.c.l.b16 %v76
    %v637 = vunpack.c.h.b16 %v76
    %v638 = vunpack.c.l.b16 %v77
    %v639 = vunpack.c.h.b16 %v77
    %v640 = vunpack.c.l.b16 %v78
    %v641 = vunpack.c.h.b16 %v78
    %v642 = vunpack.c.l.b16 %v79
    %v643 = vunpack.c.h.b16 %v79
    %v644 = vunpack.c.l.b16 %v80
    %v645 = vunpack.c.h.b16 %v80
    %v646 = vunpack.c.l.b16 %v81
    %v647 = vunpack.c.h.b16 %v81
    %v648 = vunpack.c.l.b16 %v82
    %v649 = vunpack.c.h.b16 %v82
    %v650 = vunpack.c.l.b16 %v83
    %v651 = vunpack.c.h.b16 %v83
    %v652 = vunpack.c.l.b16 %v84
    %v653 = vunpack.c.h.b16 %v84
    %v654 = vunpack.c.l.b16 %v85
    %v655 = vunpack.c.h.b16 %v85
    %v656 = vunpack.c.l.b16 %v86
    %v657 = vunpack.c.h.b16 %v86
    %v658 = vunpack.c.l.b16 %v87
    %v659 = vunpack.c.h.b16 %v87
    %v660 = vunpack.c.l.b16 %v88
    %v661 = vunpack.c.h.b16 %v88
    %v662 = vunpack.c.l.b16 %v89
    %v663 = vunpack.c.h.b16 %v89
    %v664 = vunpack.c.l.b16 %v90
    %v665 = vunpack.c.h.b16 %v90
    %v666 = vunpack.c.l.b16 %v91
    %v667 = vunpack.c.h.b16 %v91
    %v668 = vunpack.c.l.b16 %v92
    %v669 = vunpack.c.h.b16 %v92
    %v670 = vunpack.c.l.b16 %v93
    %v671 = vunpack.c.h.b16 %v93
    %v672 = vunpack.c.l.b16 %v94
    %v673 = vunpack.c.h.b16 %v94
    %v674 = vunpack.c.l.b16 %v95
    %v675 = vunpack.c.h.b16 %v95
    %v676 = vunpack.c.l.b16 %v96
    %v677 = vunpack.c.h.b16 %v96
    %v678 = vunpack.c.l.b16 %v97
    %v679 = vunpack.c.h.b16 %v97
    %v680 = vunpack.c.l.b16 %v98
    %v681 = vunpack.c.h.b16 %v98
    %v682 = vunpack.c.l.b16 %v99
    %v683 = vunpack.c.h.b16 %v99
    %v684 = vunpack.c.l.b16 %v100
    %v685 = vunpack.c.h.b16 %v100
    %v686 = vunpack.c.l.b16 %v101
    %v687 = vunpack.c.h.b16 %v101
    %v688 = vunpack.c.l.b16 %v102
    %v689 = vunpack.c.h.b16 %v102
    %v690 = vunpack.c.l.b16 %v103
    %v691 = vunpack.c.h.b16 %v103
    %v692 = vunpack.c.l.b16 %v104
    %v693 = vunpack.c.h.b16 %v104
    %v694 = vunpack.c.l.b16 %v105
    %v695 = vunpack.c.h.b16 %v105
    %v696 = vunpack.c.l.b16 %v106
    %v697 = vunpack.c.h.b16 %v106
    %v698 = vunpack.c.l.b16 %v107
    %v699 = vunpack.c.h.b16 %v107
    %v700 = vunpack.c.l.b16 %v108
    %v701 = vunpack.c.h.b16 %v108
    %v702 = vunpack.c.l.b16 %v109
    %v703 = vunpack.c.h.b16 %v109
    %v704 = vunpack.c.l.b16 %v110
    %v705 = vunpack.c.h.b16 %v110
    %v706 = vunpack.c.l.b16 %v111
    %v707 = vunpack.c.h.b16 %v111
    %v708 = vunpack.c.l.b16 %v112
    %v709 = vunpack.c.h.b16 %v112
    %v710 = vunpack.c.l.b16 %v113
    %v711 = vunpack.c.h.b16 %v113
    %v712 = vunpack.c.l.b16 %v114
    %v713 = vunpack.c.h.b16 %v114
    %v714 = vunpack.c.l.b16 %v115
    %v715 = vunpack.c.h.b16 %v115
    %v716 = vunpack.c.l.b16 %v116
    %v717 = vunpack.c.h.b16 %v116
    %v718 = vunpack.c.l.b16 %v117
    %v719 = vunpack.c.h.b16 %v117
    %v720 = vunpack.c.l.b16 %v118
    %v721 = vunpack.c.h.b16 %v118
    %v722 = vunpack.c.l.b16 %v119
    %v723 = vunpack.c.h.b16 %v119
    %v724 = vunpack.c.l.b16 %v120
    %v725 = vunpack.c.h.b16 %v120
    %v726 = vunpack.c.l.b16 %v121
    %v727 = vunpack.c.h.b16 %v121
    %v728 = vunpack.c.l.b16 %v122
    %v729 = vunpack.c.h.b16 %v122
    %v730 = vunpack.c.l.b16 %v123
    %v731 = vunpack.c.h.b16 %v123
    %v732 = vunpack.c.l.b16 %v124
    %v733 = vunpack.c.h.b16 %v124
    %v734 = vunpack.c.l.b16 %v125
    %v735 = vunpack.c.h.b16 %v125
    %v736 = vunpack.c.l.b16 %v126
    %v737 = vunpack.c.h.b16 %v126
    %v738 = vunpack.c.l.b16 %v127
    %v739 = vunpack.c.h.b16 %v127
    %v740 = vunpack.c.l.b16 %v128
    %v741 = vunpack.c.h.b16 %v128
    %v742 = vunpack.c.l.b16 %v129
    %v743 = vunpack.c.h.b16 %v129
    %v744 = vunpack.c.l.b16 %v130
    %v745 = vunpack.c.h.b16 %v130
    %v746 = vunpack.c.l.b16 %v131
    %v747 = vunpack.c.h.b16 %v131
    %v748 = vunpack.c.l.b16 %v132
    %v749 = vunpack.c.h.b16 %v132
    %v750 = vunpack.c.l.b16 %v133
    %v751 = vunpack.c.h.b16 %v133
    %v752 = vunpack.c.l.b16 %v134
    %v753 = vunpack.c.h.b16 %v134
    %v754 = vunpack.c.l.b16 %v135
    %v755 = vunpack.c.h.b16 %v135
    %v756 = vunpack.c.l.b16 %v136
    %v757 = vunpack.c.h.b16 %v136
    %v758 = vunpack.c.l.b16 %v137
    %v759 = vunpack.c.h.b16 %v137
    %v760 = vunpack.c.l.b16 %v138
    %v761 = vunpack.c.h.b16 %v138
    %v762 = vunpack.c.l.b16 %v139
    %v763 = vunpack.c.h.b16 %v139
    %v764 = vunpack.c.l.b16 %v140
    %v765 = vunpack.c.h.b16 %v140
    %v766 = vunpack.c.l.b16 %v141
    %v767 = vunpack.c.h.b16 %v141
    %v768 = vunpack.c.l.b16 %v142
    %v769 = vunpack.c.h.b16 %v142
    %v770 = vunpack.c.l.b16 %v143
    %v771 = vunpack.c.h.b16 %v143
    %v772 = vunpack.c.l.b16 %v144
    %v773 = vunpack.c.h.b16 %v144
    %v774 = vunpack.c.l.b16 %v145
    %v775 = vunpack.c.h.b16 %v145
    %v776 = vunpack.c.l.b16 %v146
    %v777 = vunpack.c.h.b16 %v146
    %v778 = vunpack.c.l.b16 %v147
    %v779 = vunpack.c.h.b16 %v147
    %v780 = vunpack.c.l.b16 %v148
    %v781 = vunpack.c.h.b16 %v148
    %v782 = vunpack.c.l.b16 %v149
    %v783 = vunpack.c.h.b16 %v149
    %v784 = vunpack.c.l.b16 %v150
    %v785 = vunpack.c.h.b16 %v150
    %v786 = vunpack.c.l.b16 %v151
    %v787 = vunpack.c.h.b16 %v151
    %v788 = vunpack.c.l.b16 %v152
    %v789 = vunpack.c.h.b16 %v152
    %v790 = vunpack.c.l.b16 %v153
    %v791 = vunpack.c.h.b16 %v153
    %v792 = vunpack.c.l.b16 %v154
    %v793 = vunpack.c.h.b16 %v154
    %v794 = vunpack.c.l.b16 %v155
    %v795 = vunpack.c.h.b16 %v155
    %v796 = vunpack.c.l.b16 %v156
    %v797 = vunpack.c.h.b16 %v156
    %v798 = vunpack.c.l.b16 %v157
    %v799 = vunpack.c.h.b16 %v157
    %v800 = vunpack.c.l.b16 %v158
    %v801 = vunpack.c.h.b16 %v158
    %v802 = vunpack.c.l.b16 %v159
    %v803 = vunpack.c.h.b16 %v159
    %v804 = vunpack.c.l.b16 %v160
    %v805 = vunpack.c.h.b16 %v160
    %v806 = vunpack.c.l.b16 %v161
    %v807 = vunpack.c.h.b16 %v161
    %v808 = vunpack.c.l.b16 %v162
    %v809 = vunpack.c.h.b16 %v162
    %v810 = vunpack.c.l.b16 %v163
    %v811 = vunpack.c.h.b16 %v163
    %v812 = vunpack.c.l.b16 %v164
    %v813 = vunpack.c.h.b16 %v164
    %v814 = vunpack.c.l.b16 %v165
    %v815 = vunpack.c.h.b16 %v165
    %v816 = vunpack.c.l.b16 %v166
    %v817 = vunpack.c.h.b16 %v166
    %v818 = vunpack.c.l.b16 %v167
    %v819 = vunpack.c.h.b16 %v167
    %v820 = vunpack.c.l.b16 %v168
    %v821 = vunpack.c.h.b16 %v168
    %v822 = vunpack.c.l.b16 %v169
    %v823 = vunpack.c.h.b16 %v169
    %v824 = vunpack.c.l.b16 %v170
    %v825 = vunpack.c.h.b16 %v170
    %v826 = vunpack.c.l.b16 %v171
    %v827 = vunpack.c.h.b16 %v171
    %v828 = vunpack.c.l.b16 %v172
    %v829 = vunpack.c.h.b16 %v172
    %v830 = vunpack.c.l.b16 %v173
    %v831 = vunpack.c.h.b16 %v173
    %v832 = vunpack.c.l.b16 %v174
    %v833 = vunpack.c.h.b16 %v174
    %v834 = vunpack.c.l.b16 %v175
    %v835 = vunpack.c.h.b16 %v175
    %v836 = vunpack.c.l.b16 %v176
    %v837 = vunpack.c.h.b16 %v176
    %v838 = vunpack.c.l.b16 %v177
    %v839 = vunpack.c.h.b16 %v177
    %v840 = vunpack.c.l.b16 %v178
    %v841 = vunpack.c.h.b16 %v178
    %v842 = vunpack.c.l.b16 %v179
    %v843 = vunpack.c.h.b16 %v179
    %v844 = vunpack.c.l.b16 %v180
    %v845 = vunpack.c.h.b16 %v180
    %v846 = vunpack.c.l.b16 %v181
    %v847 = vunpack.c.h.b16 %v181
    %v848 = vunpack.c.l.b16 %v182
    %v849 = vunpack.c.h.b16 %v182
    %v850 = vunpack.c.l.b16 %v183
    %v851 = vunpack.c.h.b16 %v183
    %v852 = vunpack.c.l.b16 %v184
    %v853 = vunpack.c.h.b16 %v184
    %v854 = vunpack.c.l.b16 %v185
    %v855 = vunpack.c.h.b16 %v185
    %v856 = vunpack.c.l.b16 %v186
    %v857 = vunpack.c.h.b16 %v186
    %v858 = vunpack.c.l.b16 %v187
    %v859 = vunpack.c.h.b16 %v187
    %v860 = vunpack.c.l.b16 %v188
    %v861 = vunpack.c.h.b16 %v188
    %v862 = vunpack.c.l.b16 %v189
    %v863 = vunpack.c.h.b16 %v189
    %v864 = vunpack.c.l.b16 %v190
    %v865 = vunpack.c.h.b16 %v190
    %v866 = vunpack.c.l.b16 %v191
    %v867 = vunpack.c.h.b16 %v191
    %v868 = vunpack.c.l.b16 %v192
    %v869 = vunpack.c.h.b16 %v192
    %v870 = vunpack.c.l.b16 %v193
    %v871 = vunpack.c.h.b16 %v193
    %v872 = vunpack.c.l.b16 %v194
    %v873 = vunpack.c.h.b16 %v194
    %v874 = vunpack.c.l.b16 %v195
    %v875 = vunpack.c.h.b16 %v195
    %v876 = vunpack.c.l.b16 %v196
    %v877 = vunpack.c.h.b16 %v196
    %v878 = vunpack.c.l.b16 %v197
    %v879 = vunpack.c.h.b16 %v197
    %v880 = vunpack.c.l.b16 %v198
    %v881 = vunpack.c.h.b16 %v198
    %v882 = vunpack.c.l.b16 %v199
    %v883 = vunpack.c.h.b16 %v199
    %v884 = vunpack.c.l.b16 %v200
    %v885 = vunpack.c.h.b16 %v200
    %v886 = vunpack.c.l.b16 %v201
    %v887 = vunpack.c.h.b16 %v201
    %v888 = vunpack.c.l.b16 %v202
    %v889 = vunpack.c.h.b16 %v202
    %v890 = vunpack.c.l.b16 %v203
    %v891 = vunpack.c.h.b16 %v203
    %v892 = vunpack.c.l.b16 %v204
    %v893 = vunpack.c.h.b16 %v204
    %v894 = vunpack.c.l.b16 %v205
    %v895 = vunpack.c.h.b16 %v205
    %v896 = vunpack.c.l.b16 %v206
    %v897 = vunpack.c.h.b16 %v206
    %v898 = vunpack.c.l.b16 %v207
    %v899 = vunpack.c.h.b16 %v207
    %v900 = vunpack.c.l.b16 %v208
    %v901 = vunpack.c.h.b16 %v208
    %v902 = vunpack.c.l.b16 %v209
    %v903 = vunpack.c.h.b16 %v209
    %v904 = vunpack.c.l.b16 %v210
    %v905 = vunpack.c.h.b16 %v210
    %v906 = vunpack.c.l.b16 %v211
    %v907 = vunpack.c.h.b16 %v211
    %v908 = vunpack.c.l.b16 %v212
    %v909 = vunpack.c.h.b16 %v212
    %v910 = vunpack.c.l.b16 %v213
    %v911 = vunpack.c.h.b16 %v213
    %v912 = vunpack.c.l.b16 %v214
    %v913 = vunpack.c.h.b16 %v214
    %v914 = vunpack.c.l.b16 %v215
    %v915 = vunpack.c.h.b16 %v215
    %v916 = vunpack.c.l.b16 %v216
    %v917 = vunpack.c.h.b16 %v216
    %v918 = vunpack.c.l.b16 %v217
    %v919 = vunpack.c.h.b16 %v217
    %v920 = vunpack.c.l.b16 %v218
    %v921 = vunpack.c.h.b16 %v218
    %v922 = vunpack.c.l.b16 %v219
    %v923 = vunpack.c.h.b16 %v219
    %v924 = vunpack.c.l.b16 %v220
    %v925 = vunpack.c.h.b16 %v220
    %v926 = vunpack.c.l.b16 %v221
    %v927 = vunpack.c.h.b16 %v221
    %v928 = vunpack.c.l.b16 %v222
    %v929 = vunpack.c.h.b16 %v222
    %v930 = vunpack.c.l.b16 %v223
    %v931 = vunpack.c.h.b16 %v223
    %v932 = vunpack.c.l.b16 %v224
    %v933 = vunpack.c.h.b16 %v224
    %v934 = vunpack.c.l.b16 %v225
    %v935 = vunpack.c.h.b16 %v225
    %v936 = vunpack.c.l.b16 %v226
    %v937 = vunpack.c.h.b16 %v226
    %v938 = vunpack.c.l.b16 %v227
    %v939 = vunpack.c.h.b16 %v227
    %v940 = vunpack.c.l.b16 %v228
    %v941 = vunpack.c.h.b16 %v228
    %v942 = vunpack.c.l.b16 %v229
    %v943 = vunpack.c.h.b16 %v229
    %v944 = vunpack.c.l.b16 %v230
    %v945 = vunpack.c.h.b16 %v230
    %v946 = vunpack.c.l.b16 %v231
    %v947 = vunpack.c.h.b16 %v231
    %v948 = vunpack.c.l.b16 %v232
    %v949 = vunpack.c.h.b16 %v232
    %v950 = vunpack.c.l.b16 %v233
    %v951 = vunpack.c.h.b16 %v233
    %v952 = vunpack.c.l.b16 %v234
    %v953 = vunpack.c.h.b16 %v234
    %v954 = vunpack.c.l.b16 %v235
    %v955 = vunpack.c.h.b16 %v235
    %v956 = vunpack.c.l.b16 %v236
    %v957 = vunpack.c.h.b16 %v236
    %v958 = vunpack.c.l.b16 %v237
    %v959 = vunpack.c.h.b16 %v237
    %v960 = vunpack.c.l.b16 %v238
    %v961 = vunpack.c.h.b16 %v238
    %v962 = vunpack.c.l.b16 %v239
    %v963 = vunpack.c.h.b16 %v239
    %v964 = vunpack.c.l.b16 %v240
    %v965 = vunpack.c.h.b16 %v240
    %v966 = vunpack.c.l.b16 %v241
    %v967 = vunpack.c.h.b16 %v241
    %v968 = vunpack.c.l.b16 %v242
    %v969 = vunpack.c.h.b16 %v242
    %v970 = vunpack.c.l.b16 %v243
    %v971 = vunpack.c.h.b16 %v243
    %v972 = vunpack.c.l.b16 %v244
    %v973 = vunpack.c.h.b16 %v244
    %v974 = vunpack.c.l.b16 %v245
    %v975 = vunpack.c.h.b16 %v245
    %v976 = vunpack.c.l.b16 %v246
    %v977 = vunpack.c.h.b16 %v246
    %v978 = vunpack.c.l.b16 %v247
    %v979 = vunpack.c.h.b16 %v247
    %v980 = vunpack.c.l.b16 %v248
    %v981 = vunpack.c.h.b16 %v248
    %v982 = vunpack.c.l.b16 %v249
    %v983 = vunpack.c.h.b16 %v249
    %v984 = vunpack.c.l.b16 %v250
    %v985 = vunpack.c.h.b16 %v250
    %v986 = vunpack.c.l.b16 %v251
    %v987 = vunpack.c.h.b16 %v251
    %v988 = vunpack.c.l.b16 %v252
    %v989 = vunpack.c.h.b16 %v252
    %v990 = vunpack.c.l.b16 %v253
    %v991 = vunpack.c.h.b16 %v253
    %v992 = vunpack.c.l.b16 %v254
    %v993 = vunpack.c.h.b16 %v254
    %v994 = vunpack.c.l.b16 %v255
    %v995 = vunpack.c.h.b16 %v255
    %v996 = vunpack.c.l.b16 %v256
    %v997 = vunpack.c.h.b16 %v256
    %v998 = vunpack.c.l.b16 %v257
    %v999 = vunpack.c.h.b16 %v257
    %v1000 = vunpack.c.l.b16 %v258
    %v1001 = vunpack.c.h.b16 %v258
    %v1002 = vunpack.c.l.b16 %v259
    %v1003 = vunpack.c.h.b16 %v259
    %v1004 = vunpack.c.l.b16 %v260
    %v1005 = vunpack.c.h.b16 %v260
    %v1006 = vunpack.c.l.b16 %v261
    %v1007 = vunpack.c.h.b16 %v261
    %v1008 = vunpack.c.l.b16 %v262
    %v1009 = vunpack.c.h.b16 %v262
    %v1010 = vunpack.c.l.b16 %v263
    %v1011 = vunpack.c.h.b16 %v263
    %v1012 = vunpack.c.l.b16 %v264
    %v1013 = vunpack.c.h.b16 %v264
    %v1014 = vunpack.c.l.b16 %v265
    %v1015 = vunpack.c.h.b16 %v265
    %v1016 = vunpack.c.l.b16 %v266
    %v1017 = vunpack.c.h.b16 %v266
    %v1018 = vunpack.c.l.b16 %v267
    %v1019 = vunpack.c.h.b16 %v267
    %v1020 = vunpack.c.l.b16 %v268
    %v1021 = vunpack.c.h.b16 %v268
    %v1022 = vunpack.c.l.b16 %v269
    %v1023 = vunpack.c.h.b16 %v269
    %v1024 = vunpack.c.l.b16 %v270
    %v1025 = vunpack.c.h.b16 %v270
    %v1026 = vunpack.c.l.b16 %v271
    %v1027 = vunpack.c.h.b16 %v271
    %v1028 = vunpack.c.l.b16 %v272
    %v1029 = vunpack.c.h.b16 %v272
    %v1030 = vunpack.c.l.b16 %v273
    %v1031 = vunpack.c.h.b16 %v273
    %v1032 = vunpack.c.l.b16 %v274
    %v1033 = vunpack.c.h.b16 %v274
    %v1034 = vunpack.c.l.b16 %v275
    %v1035 = vunpack.c.h.b16 %v275
    %v1036 = vunpack.c.l.b16 %v276
    %v1037 = vunpack.c.h.b16 %v276
    %v1038 = vunpack.c.l.b16 %v277
    %v1039 = vunpack.c.h.b16 %v277
    %v1040 = vunpack.c.l.b16 %v278
    %v1041 = vunpack.c.h.b16 %v278
    %v1042 = vunpack.c.l.b16 %v279
    %v1043 = vunpack.c.h.b16 %v279
    %v1044 = vunpack.c.l.b16 %v280
    %v1045 = vunpack.c.h.b16 %v280
    %v1046 = vunpack.c.l.b16 %v281
    %v1047 = vunpack.c.h.b16 %v281
    %v1048 = vunpack.c.l.b16 %v282
    %v1049 = vunpack.c.h.b16 %v282
    %v1050 = vunpack.c.l.b16 %v283
    %v1051 = vunpack.c.h.b16 %v283
    %v1052 = vunpack.c.l.b16 %v284
    %v1053 = vunpack.c.h.b16 %v284
    %v1054 = vunpack.c.l.b16 %v285
    %v1055 = vunpack.c.h.b16 %v285
    %v1056 = vunpack.c.l.b16 %v286
    %v1057 = vunpack.c.h.b16 %v286
    %v1058 = vunpack.c.l.b16 %v287
    %v1059 = vunpack.c.h.b16 %v287
    %v1060 = vunpack.c.l.b16 %v288
    %v1061 = vunpack.c.h.b16 %v288
    %v1062 = vunpack.c.l.b16 %v289
    %v1063 = vunpack.c.h.b16 %v289
    %v1064 = vunpack.c.l.b16 %v290
    %v1065 = vunpack.c.h.b16 %v290
    %v1066 = vunpack.c.l.b16 %v291
    %v1067 = vunpack.c.h.b16 %v291
    %v1068 = vunpack.c.l.b16 %v292
    %v1069 = vunpack.c.h.b16 %v292
    %v1070 = vunpack.c.l.b16 %v293
    %v1071 = vunpack.c.h.b16 %v293
    %v1072 = vunpack.c.l.b16 %v294
    %v1073 = vunpack.c.h.b16 %v294
    %v1074 = vunpack.c.l.b16 %v295
    %v1075 = vunpack.c.h.b16 %v295
    %v1076 = vunpack.c.l.b16 %v296
    %v1077 = vunpack.c.h.b16 %v296
    %v1078 = vunpack.c.l.b16 %v297
    %v1079 = vunpack.c.h.b16 %v297
    %v1080 = vunpack.c.l.b16 %v298
    %v1081 = vunpack.c.h.b16 %v298
    %v1082 = vunpack.c.l.b16 %v299
    %v1083 = vunpack.c.h.b16 %v299
    %v1084 = vunpack.c.l.b16 %v300
    %v1085 = vunpack.c.h.b16 %v300
    %v1086 = vunpack.c.l.b16 %v301
    %v1087 = vunpack.c.h.b16 %v301
    %v1088 = vunpack.c.l.b16 %v302
    %v1089 = vunpack.c.h.b16 %v302
    %v1090 = vunpack.c.l.b16 %v303
    %v1091 = vunpack.c.h.b16 %v303
    %v1092 = vunpack.c.l.b16 %v304
    %v1093 = vunpack.c.h.b16 %v304
    %v1094 = vunpack.c.l.b16 %v305
    %v1095 = vunpack.c.h.b16 %v305
    %v1096 = vunpack.c.l.b16 %v306
    %v1097 = vunpack.c.h.b16 %v306
    %v1098 = vunpack.c.l.b16 %v307
    %v1099 = vunpack.c.h.b16 %v307
    %v1100 = vunpack.c.l.b16 %v308
    %v1101 = vunpack.c.h.b16 %v308
    %v1102 = vunpack.c.l.b16 %v309
    %v1103 = vunpack.c.h.b16 %v309
    %v1104 = vunpack.c.l.b16 %v310
    %v1105 = vunpack.c.h.b16 %v310
    %v1106 = vunpack.c.l.b16 %v311
    %v1107 = vunpack.c.h.b16 %v311
    %v1108 = vunpack.c.l.b16 %v312
    %v1109 = vunpack.c.h.b16 %v312
    %v1110 = vunpack.c.l.b16 %v313
    %v1111 = vunpack.c.h.b16 %v313
    %v1112 = vunpack.c.l.b16 %v314
    %v1113 = vunpack.c.h.b16 %v314
    %v1114 = vunpack.c.l.b16 %v315
    %v1115 = vunpack.c.h.b16 %v315
    %v1116 = vpack.c.b16 %v612, %v604
    %v1117 = vpack.c.b16 %v613, %v605
    %v1118 = vpack.c.b16 %v614, %v606
    %v1119 = vpack.c.b16 %v615, %v607
    %v1120 = vpack.c.b16 %v616, %v608
    %v1121 = vpack.c.b16 %v617, %v609
    %v1122 = vpack.c.b16 %v618, %v610
    %v1123 = vpack.c.b16 %v619, %v611
    %v1124 = vpack.c.b16 %v628, %v620
    %v1125 = vpack.c.b16 %v629, %v621
    %v1126 = vpack.c.b16 %v630, %v622
    %v1127 = vpack.c.b16 %v631, %v623
    %v1128 = vpack.c.b16 %v632, %v624
    %v1129 = vpack.c.b16 %v633, %v625
    %v1130 = vpack.c.b16 %v634, %v626
    %v1131 = vpack.c.b16 %v635, %v627
    %v1132 = vpack.c.b16 %v644, %v636
    %v1133 = vpack.c.b16 %v645, %v637
    %v1134 = vpack.c.b16 %v646, %v638
    %v1135 = vpack.c.b16 %v647, %v639
    %v1136 = vpack.c.b16 %v648, %v640
    %v1137 = vpack.c.b16 %v649, %v641
    %v1138 = vpack.c.b16 %v650, %v642
    %v1139 = vpack.c.b16 %v651, %v643
    %v1140 = vpack.c.b16 %v660, %v652
    %v1141 = vpack.c.b16 %v661, %v653
    %v1142 = vpack.c.b16 %v662, %v654
    %v1143 = vpack.c.b16 %v663, %v655
    %v1144 = vpack.c.b16 %v664, %v656
    %v1145 = vpack.c.b16 %v665, %v657
    %v1146 = vpack.c.b16 %v666, %v658
    %v1147 = vpack.c.b16 %v667, %v659
    %v1148 = vpack.c.b16 %v676, %v668
    %v1149 = vpack.c.b16 %v677, %v669
    %v1150 = vpack.c.b16 %v678, %v670
    %v1151 = vpack.c.b16 %v679, %v671
    %v1152 = vpack.c.b16 %v680, %v672
    %v1153 = vpack.c.b16 %v681, %v673
    %v1154 = vpack.c.b16 %v682, %v674
    %v1155 = vpack.c.b16 %v683, %v675
    %v1156 = vpack.c.b16 %v692, %v684
    %v1157 = vpack.c.b16 %v693, %v685
    %v1158 = vpack.c.b16 %v694, %v686
    %v1159 = vpack.c.b16 %v695, %v687
    %v1160 = vpack.c.b16 %v696, %v688
    %v1161 = vpack.c.b16 %v697, %v689
    %v1162 = vpack.c.b16 %v698, %v690
    %v1163 = vpack.c.b16 %v699, %v691
    %v1164 = vpack.c.b16 %v708, %v700
    %v1165 = vpack.c.b16 %v709, %v701
    %v1166 = vpack.c.b16 %v710, %v702
    %v1167 = vpack.c.b16 %v711, %v703
    %v1168 = vpack.c.b16 %v712, %v704
    %v1169 = vpack.c.b16 %v713, %v705
    %v1170 = vpack.c.b16 %v714, %v706
    %v1171 = vpack.c.b16 %v715, %v707
    %v1172 = vpack.c.b16 %v724, %v716
    %v1173 = vpack.c.b16 %v725, %v717
    %v1174 = vpack.c.b16 %v726, %v718
    %v1175 = vpack.c.b16 %v727, %v719
    %v1176 = vpack.c.b16 %v728, %v720
    %v1177 = vpack.c.b16 %v729, %v721
    %v1178 = vpack.c.b16 %v730, %v722
    %v1179 = vpack.c.b16 %v731, %v723
    %v1180 = vpack.c.b16 %v740, %v732
    %v1181 = vpack.c.b16 %v741, %v733
    %v1182 = vpack.c.b16 %v742, %v734
    %v1183 = vpack.c.b16 %v743, %v735
    %v1184 = vpack.c.b16 %v744, %v736
    %v1185 = vpack.c.b16 %v745, %v737
    %v1186 = vpack.c.b16 %v746, %v738
    %v1187 = vpack.c.b16 %v747, %v739
    %v1188 = vpack.c.b16 %v756, %v748
    %v1189 = vpack.c.b16 %v757, %v749
    %v1190 = vpack.c.b16 %v758, %v750
    %v1191 = vpack.c.b16 %v759, %v751
    %v1192 = vpack.c.b16 %v760, %v752
    %v1193 = vpack.c.b16 %v761, %v753
    %v1194 = vpack.c.b16 %v762, %v754
    %v1195 = vpack.c.b16 %v763, %v755
    %v1196 = vpack.c.b16 %v772, %v764
    %v1197 = vpack.c.b16 %v773, %v765
    %v1198 = vpack.c.b16 %v774, %v766
    %v1199 = vpack.c.b16 %v775, %v767
    %v1200 = vpack.c.b16 %v776, %v768
    %v1201 = vpack.c.b16 %v777, %v769
    %v1202 = vpack.c.b16 %v778, %v770
    %v1203 = vpack.c.b16 %v779, %v771
    %v1204 = vpack.c.b16 %v788, %v780
    %v1205 = vpack.c.b16 %v789, %v781
    %v1206 = vpack.c.b16 %v790, %v782
    %v1207 = vpack.c.b16 %v791, %v783
    %v1208 = vpack.c.b16 %v792, %v784
    %v1209 = vpack.c.b16 %v793, %v785
    %v1210 = vpack.c.b16 %v794, %v786
    %v1211 = vpack.c.b16 %v795, %v787
    %v1212 = vpack.c.b16 %v804, %v796
    %v1213 = vpack.c.b16 %v805, %v797
    %v1214 = vpack.c.b16 %v806, %v798
    %v1215 = vpack.c.b16 %v807, %v799
    %v1216 = vpack.c.b16 %v808, %v800
    %v1217 = vpack.c.b16 %v809, %v801
    %v1218 = vpack.c.b16 %v810, %v802
    %v1219 = vpack.c.b16 %v811, %v803
    %v1220 = vpack.c.b16 %v820, %v812
    %v1221 = vpack.c.b16 %v821, %v813
    %v1222 = vpack.c.b16 %v822, %v814
    %v1223 = vpack.c.b16 %v823, %v815
    %v1224 = vpack.c.b16 %v824, %v816
    %v1225 = vpack.c.b16 %v825, %v817
    %v1226 = vpack.c.b16 %v826, %v818
    %v1227 = vpack.c.b16 %v827, %v819
    %v1228 = vpack.c.b16 %v836, %v828
    %v1229 = vpack.c.b16 %v837, %v829
    %v1230 = vpack.c.b16 %v838, %v830
    %v1231 = vpack.c.b16 %v839, %v831
    %v1232 = vpack.c.b16 %v840, %v832
    %v1233 = vpack.c.b16 %v841, %v833
    %v1234 = vpack.c.b16 %v842, %v834
    %v1235 = vpack.c.b16 %v843, %v835
    %v1236 = vpack.c.b16 %v852, %v844
    %v1237 = vpack.c.b16 %v853, %v845
    %v1238 = vpack.c.b16 %v854, %v846
    %v1239 = vpack.c.b16 %v855, %v847
    %v1240 = vpack.c.b16 %v856, %v848
    %v1241 = vpack.c.b16 %v857, %v849
    %v1242 = vpack.c.b16 %v858, %v850
    %v1243 = vpack.c.b16 %v859, %v851
    %v1244 = vpack.c.b16 %v868, %v860
    %v1245 = vpack.c.b16 %v869, %v861
    %v1246 = vpack.c.b16 %v870, %v862
    %v1247 = vpack.c.b16 %v871, %v863
    %v1248 = vpack.c.b16 %v872, %v864
    %v1249 = vpack.c.b16 %v873, %v865
    %v1250 = vpack.c.b16 %v874, %v866
    %v1251 = vpack.c.b16 %v875, %v867
    %v1252 = vpack.c.b16 %v884, %v876
    %v1253 = vpack.c.b16 %v885, %v877
    %v1254 = vpack.c.b16 %v886, %v878
    %v1255 = vpack.c.b16 %v887, %v879
    %v1256 = vpack.c.b16 %v888, %v880
    %v1257 = vpack.c.b16 %v889, %v881
    %v1258 = vpack.c.b16 %v890, %v882
    %v1259 = vpack.c.b16 %v891, %v883
    %v1260 = vpack.c.b16 %v900, %v892
    %v1261 = vpack.c.b16 %v901, %v893
    %v1262 = vpack.c.b16 %v902, %v894
    %v1263 = vpack.c.b16 %v903, %v895
    %v1264 = vpack.c.b16 %v904, %v896
    %v1265 = vpack.c.b16 %v905, %v897
    %v1266 = vpack.c.b16 %v906, %v898
    %v1267 = vpack.c.b16 %v907, %v899
    %v1268 = vpack.c.b16 %v916, %v908
    %v1269 = vpack.c.b16 %v917, %v909
    %v1270 = vpack.c.b16 %v918, %v910
    %v1271 = vpack.c.b16 %v919, %v911
    %v1272 = vpack.c.b16 %v920, %v912
    %v1273 = vpack.c.b16 %v921, %v913
    %v1274 = vpack.c.b16 %v922, %v914
    %v1275 = vpack.c.b16 %v923, %v915
    %v1276 = vpack.c.b16 %v932, %v924
    %v1277 = vpack.c.b16 %v933, %v925
    %v1278 = vpack.c.b16 %v934, %v926
    %v1279 = vpack.c.b16 %v935, %v927
    %v1280 = vpack.c.b16 %v936, %v928
    %v1281 = vpack.c.b16 %v937, %v929
    %v1282 = vpack.c.b16 %v938, %v930
    %v1283 = vpack.c.b16 %v939, %v931
    %v1284 = vpack.c.b16 %v948, %v940
    %v1285 = vpack.c.b16 %v949, %v941
    %v1286 = vpack.c.b16 %v950, %v942
    %v1287 = vpack.c.b16 %v951, %v943
    %v1288 = vpack.c.b16 %v952, %v944
    %v1289 = vpack.c.b16 %v953, %v945
    %v1290 = vpack.c.b16 %v954, %v946
    %v1291 = vpack.c.b16 %v955, %v947
    %v1292 = vpack.c.b16 %v964, %v956
    %v1293 = vpack.c.b16 %v965, %v957
    %v1294 = vpack.c.b16 %v966, %v958
    %v1295 = vpack.c.b16 %v967, %v959
    %v1296 = vpack.c.b16 %v968, %v960
    %v1297 = vpack.c.b16 %v969, %v961
    %v1298 = vpack.c.b16 %v970, %v962
    %v1299 = vpack.c.b16 %v971, %v963
    %v1300 = vpack.c.b16 %v980, %v972
    %v1301 = vpack.c.b16 %v981, %v973
    %v1302 = vpack.c.b16 %v982, %v974
    %v1303 = vpack.c.b16 %v983, %v975
    %v1304 = vpack.c.b16 %v984, %v976
    %v1305 = vpack.c.b16 %v985, %v977
    %v1306 = vpack.c.b16 %v986, %v978
    %v1307 = vpack.c.b16 %v987, %v979
    %v1308 = vpack.c.b16 %v996, %v988
    %v1309 = vpack.c.b16 %v997, %v989
    %v1310 = vpack.c.b16 %v998, %v990
    %v1311 = vpack.c.b16 %v999, %v991
    %v1312 = vpack.c.b16 %v1000, %v992
    %v1313 = vpack.c.b16 %v1001, %v993
    %v1314 = vpack.c.b16 %v1002, %v994
    %v1315 = vpack.c.b16 %v1003, %v995
    %v1316 = vpack.c.b16 %v1012, %v1004
    %v1317 = vpack.c.b16 %v1013, %v1005
    %v1318 = vpack.c.b16 %v1014, %v1006
    %v1319 = vpack.c.b16 %v1015, %v1007
    %v1320 = vpack.c.b16 %v1016, %v1008
    %v1321 = vpack.c.b16 %v1017, %v1009
    %v1322 = vpack.c.b16 %v1018, %v1010
    %v1323 = vpack.c.b16 %v1019, %v1011
    %v1324 = vpack.c.b16 %v1028, %v1020
    %v1325 = vpack.c.b16 %v1029, %v1021
    %v1326 = vpack.c.b16 %v1030, %v1022
    %v1327 = vpack.c.b16 %v1031, %v1023
    %v1328 = vpack.c.b16 %v1032, %v1024
    %v1329 = vpack.c.b16 %v1033, %v1025
    %v1330 = vpack.c.b16 %v1034, %v1026
    %v1331 = vpack.c.b16 %v1035, %v1027
    %v1332 = vpack.c.b16 %v1044, %v1036
    %v1333 = vpack.c.b16 %v1045, %v1037
    %v1334 = vpack.c.b16 %v1046, %v1038
    %v1335 = vpack.c.b16 %v1047, %v1039
    %v1336 = vpack.c.b16 %v1048, %v1040
    %v1337 = vpack.c.b16 %v1049, %v1041
    %v1338 = vpack.c.b16 %v1050, %v1042
    %v1339 = vpack.c.b16 %v1051, %v1043
    %v1340 = vpack.c.b16 %v1060, %v1052
    %v1341 = vpack.c.b16 %v1061, %v1053
    %v1342 = vpack.c.b16 %v1062, %v1054
    %v1343 = vpack.c.b16 %v1063, %v1055
    %v1344 = vpack.c.b16 %v1064, %v1056
    %v1345 = vpack.c.b16 %v1065, %v1057
    %v1346 = vpack.c.b16 %v1066, %v1058
    %v1347 = vpack.c.b16 %v1067, %v1059
    %v1348 = vpack.c.b16 %v1076, %v1068
    %v1349 = vpack.c.b16 %v1077, %v1069
    %v1350 = vpack.c.b16 %v1078, %v1070
    %v1351 = vpack.c.b16 %v1079, %v1071
    %v1352 = vpack.c.b16 %v1080, %v1072
    %v1353 = vpack.c.b16 %v1081, %v1073
    %v1354 = vpack.c.b16 %v1082, %v1074
    %v1355 = vpack.c.b16 %v1083, %v1075
    %v1356 = vpack.c.b16 %v1092, %v1084
    %v1357 = vpack.c.b16 %v1093, %v1085
    %v1358 = vpack.c.b16 %v1094, %v1086
    %v1359 = vpack.c.b16 %v1095, %v1087
    %v1360 = vpack.c.b16 %v1096, %v1088
    %v1361 = vpack.c.b16 %v1097, %v1089
    %v1362 = vpack.c.b16 %v1098, %v1090
    %v1363 = vpack.c.b16 %v1099, %v1091
    %v1364 = vpack.c.b16 %v1108, %v1100
    %v1365 = vpack.c.b16 %v1109, %v1101
    %v1366 = vpack.c.b16 %v1110, %v1102
    %v1367 = vpack.c.b16 %v1111, %v1103
    %v1368 = vpack.c.b16 %v1112, %v1104
    %v1369 = vpack.c.b16 %v1113, %v1105
    %v1370 = vpack.c.b16 %v1114, %v1106
    %v1371 = vpack.c.b16 %v1115, %v1107
    %1628 = vmatpush.bf16.msra.mxu0 %v1172
    %1629 = vmatpush.bf16.msra.mxu0 %v1164
    %1630 = vmatpush.bf16.msra.mxu0 %v1156
    %1631 = vmatpush.bf16.msra.mxu0 %v1148
    %1632 = vmatpush.bf16.msra.mxu0 %v1140
    %1633 = vmatpush.bf16.msra.mxu0 %v1132
    %1634 = vmatpush.bf16.msra.mxu0 %v1124
    %1635 = vmatpush.bf16.msra.mxu0 %v1116
    %1636 = vmatmul.bf16.gmra.mxu0 %v340
    %v1637 = vpop.f32.mrf.mxu0
    %v1638 = vadd.f32 %v318, %v1637
    %v1639 = vpop.f32.mrf.mxu0
    %1640 = vdwg.mxu0
    %1641 = vmatpush.bf16.msra.mxu0 %v1236
    %1642 = vmatpush.bf16.msra.mxu0 %v1228
    %1643 = vmatpush.bf16.msra.mxu0 %v1220
    %1644 = vmatpush.bf16.msra.mxu0 %v1212
    %1645 = vmatpush.bf16.msra.mxu0 %v1204
    %1646 = vmatpush.bf16.msra.mxu0 %v1196
    %1647 = vmatpush.bf16.msra.mxu0 %v1188
    %1648 = vmatpush.bf16.msra.mxu0 %v1180
    %1649 = vmatmul.bf16.gmra.mxu0 %v341
    %v1650 = vpop.f32.mrf.mxu0
    %v1651 = vadd.f32 %v1638, %v1650
    %v1652 = vpop.f32.mrf.mxu0
    %1653 = vdwg.mxu0
    %1654 = vmatpush.bf16.msra.mxu0 %v1300
    %1655 = vmatpush.bf16.msra.mxu0 %v1292
    %1656 = vmatpush.bf16.msra.mxu0 %v1284
    %1657 = vmatpush.bf16.msra.mxu0 %v1276
    %1658 = vmatpush.bf16.msra.mxu0 %v1268
    %1659 = vmatpush.bf16.msra.mxu0 %v1260
    %1660 = vmatpush.bf16.msra.mxu0 %v1252
    %1661 = vmatpush.bf16.msra.mxu0 %v1244
    %1662 = vmatmul.bf16.gmra.mxu0 %v342
    %v1663 = vpop.f32.mrf.mxu0
    %v1664 = vadd.f32 %v1651, %v1663
    %v1665 = vpop.f32.mrf.mxu0
    %1666 = vdwg.mxu0
    %1667 = vmatpush.bf16.msra.mxu0 %v1364
    %1668 = vmatpush.bf16.msra.mxu0 %v1356
    %1669 = vmatpush.bf16.msra.mxu0 %v1348
    %1670 = vmatpush.bf16.msra.mxu0 %v1340
    %1671 = vmatpush.bf16.msra.mxu0 %v1332
    %1672 = vmatpush.bf16.msra.mxu0 %v1324
    %1673 = vmatpush.bf16.msra.mxu0 %v1316
    %1674 = vmatpush.bf16.msra.mxu0 %v1308
    %1675 = vmatmul.bf16.gmra.mxu0 %v343
    %v1676 = vpop.f32.mrf.mxu0
    %v1677 = vadd.f32 %v1664, %v1676
    %v1678 = vpop.f32.mrf.mxu0
    %1679 = vdwg.mxu0
    %1680 = vmatpush.bf16.msra.mxu0 %v1173
    %1681 = vmatpush.bf16.msra.mxu0 %v1165
    %1682 = vmatpush.bf16.msra.mxu0 %v1157
    %1683 = vmatpush.bf16.msra.mxu0 %v1149
    %1684 = vmatpush.bf16.msra.mxu0 %v1141
    %1685 = vmatpush.bf16.msra.mxu0 %v1133
    %1686 = vmatpush.bf16.msra.mxu0 %v1125
    %1687 = vmatpush.bf16.msra.mxu0 %v1117
    %1688 = vmatmul.bf16.gmra.mxu0 %v340
    %v1689 = vpop.f32.mrf.mxu0
    %v1690 = vadd.f32 %v319, %v1689
    %v1691 = vpop.f32.mrf.mxu0
    %1692 = vdwg.mxu0
    %1693 = vmatpush.bf16.msra.mxu0 %v1237
    %1694 = vmatpush.bf16.msra.mxu0 %v1229
    %1695 = vmatpush.bf16.msra.mxu0 %v1221
    %1696 = vmatpush.bf16.msra.mxu0 %v1213
    %1697 = vmatpush.bf16.msra.mxu0 %v1205
    %1698 = vmatpush.bf16.msra.mxu0 %v1197
    %1699 = vmatpush.bf16.msra.mxu0 %v1189
    %1700 = vmatpush.bf16.msra.mxu0 %v1181
    %1701 = vmatmul.bf16.gmra.mxu0 %v341
    %v1702 = vpop.f32.mrf.mxu0
    %v1703 = vadd.f32 %v1690, %v1702
    %v1704 = vpop.f32.mrf.mxu0
    %1705 = vdwg.mxu0
    %1706 = vmatpush.bf16.msra.mxu0 %v1301
    %1707 = vmatpush.bf16.msra.mxu0 %v1293
    %1708 = vmatpush.bf16.msra.mxu0 %v1285
    %1709 = vmatpush.bf16.msra.mxu0 %v1277
    %1710 = vmatpush.bf16.msra.mxu0 %v1269
    %1711 = vmatpush.bf16.msra.mxu0 %v1261
    %1712 = vmatpush.bf16.msra.mxu0 %v1253
    %1713 = vmatpush.bf16.msra.mxu0 %v1245
    %1714 = vmatmul.bf16.gmra.mxu0 %v342
    %v1715 = vpop.f32.mrf.mxu0
    %v1716 = vadd.f32 %v1703, %v1715
    %v1717 = vpop.f32.mrf.mxu0
    %1718 = vdwg.mxu0
    %1719 = vmatpush.bf16.msra.mxu0 %v1365
    %1720 = vmatpush.bf16.msra.mxu0 %v1357
    %1721 = vmatpush.bf16.msra.mxu0 %v1349
    %1722 = vmatpush.bf16.msra.mxu0 %v1341
    %1723 = vmatpush.bf16.msra.mxu0 %v1333
    %1724 = vmatpush.bf16.msra.mxu0 %v1325
    %1725 = vmatpush.bf16.msra.mxu0 %v1317
    %1726 = vmatpush.bf16.msra.mxu0 %v1309
    %1727 = vmatmul.bf16.gmra.mxu0 %v343
    %v1728 = vpop.f32.mrf.mxu0
    %v1729 = vadd.f32 %v1716, %v1728
    %v1730 = vpop.f32.mrf.mxu0
    %1731 = vdwg.mxu0
    %1732 = vmatpush.bf16.msra.mxu0 %v1174
    %1733 = vmatpush.bf16.msra.mxu0 %v1166
    %1734 = vmatpush.bf16.msra.mxu0 %v1158
    %1735 = vmatpush.bf16.msra.mxu0 %v1150
    %1736 = vmatpush.bf16.msra.mxu0 %v1142
    %1737 = vmatpush.bf16.msra.mxu0 %v1134
    %1738 = vmatpush.bf16.msra.mxu0 %v1126
    %1739 = vmatpush.bf16.msra.mxu0 %v1118
    %1740 = vmatmul.bf16.gmra.mxu0 %v340
    %v1741 = vpop.f32.mrf.mxu0
    %v1742 = vadd.f32 %v320, %v1741
    %v1743 = vpop.f32.mrf.mxu0
    %1744 = vdwg.mxu0
    %1745 = vmatpush.bf16.msra.mxu0 %v1238
    %1746 = vmatpush.bf16.msra.mxu0 %v1230
    %1747 = vmatpush.bf16.msra.mxu0 %v1222
    %1748 = vmatpush.bf16.msra.mxu0 %v1214
    %1749 = vmatpush.bf16.msra.mxu0 %v1206
    %1750 = vmatpush.bf16.msra.mxu0 %v1198
    %1751 = vmatpush.bf16.msra.mxu0 %v1190
    %1752 = vmatpush.bf16.msra.mxu0 %v1182
    %1753 = vmatmul.bf16.gmra.mxu0 %v341
    %v1754 = vpop.f32.mrf.mxu0
    %v1755 = vadd.f32 %v1742, %v1754
    %v1756 = vpop.f32.mrf.mxu0
    %1757 = vdwg.mxu0
    %1758 = vmatpush.bf16.msra.mxu0 %v1302
    %1759 = vmatpush.bf16.msra.mxu0 %v1294
    %1760 = vmatpush.bf16.msra.mxu0 %v1286
    %1761 = vmatpush.bf16.msra.mxu0 %v1278
    %1762 = vmatpush.bf16.msra.mxu0 %v1270
    %1763 = vmatpush.bf16.msra.mxu0 %v1262
    %1764 = vmatpush.bf16.msra.mxu0 %v1254
    %1765 = vmatpush.bf16.msra.mxu0 %v1246
    %1766 = vmatmul.bf16.gmra.mxu0 %v342
    %v1767 = vpop.f32.mrf.mxu0
    %v1768 = vadd.f32 %v1755, %v1767
    %v1769 = vpop.f32.mrf.mxu0
    %1770 = vdwg.mxu0
    %1771 = vmatpush.bf16.msra.mxu0 %v1366
    %1772 = vmatpush.bf16.msra.mxu0 %v1358
    %1773 = vmatpush.bf16.msra.mxu0 %v1350
    %1774 = vmatpush.bf16.msra.mxu0 %v1342
    %1775 = vmatpush.bf16.msra.mxu0 %v1334
    %1776 = vmatpush.bf16.msra.mxu0 %v1326
    %1777 = vmatpush.bf16.msra.mxu0 %v1318
    %1778 = vmatpush.bf16.msra.mxu0 %v1310
    %1779 = vmatmul.bf16.gmra.mxu0 %v343
    %v1780 = vpop.f32.mrf.mxu0
    %v1781 = vadd.f32 %v1768, %v1780
    %v1782 = vpop.f32.mrf.mxu0
    %1783 = vdwg.mxu0
    %1784 = vmatpush.bf16.msra.mxu0 %v1175
    %1785 = vmatpush.bf16.msra.mxu0 %v1167
    %1786 = vmatpush.bf16.msra.mxu0 %v1159
    %1787 = vmatpush.bf16.msra.mxu0 %v1151
    %1788 = vmatpush.bf16.msra.mxu0 %v1143
    %1789 = vmatpush.bf16.msra.mxu0 %v1135
    %1790 = vmatpush.bf16.msra.mxu0 %v1127
    %1791 = vmatpush.bf16.msra.mxu0 %v1119
    %1792 = vmatmul.bf16.gmra.mxu0 %v340
    %v1793 = vpop.f32.mrf.mxu0
    %v1794 = vadd.f32 %v321, %v1793
    %v1795 = vpop.f32.mrf.mxu0
    %1796 = vdwg.mxu0
    %1797 = vmatpush.bf16.msra.mxu0 %v1239
    %1798 = vmatpush.bf16.msra.mxu0 %v1231
    %1799 = vmatpush.bf16.msra.mxu0 %v1223
    %1800 = vmatpush.bf16.msra.mxu0 %v1215
    %1801 = vmatpush.bf16.msra.mxu0 %v1207
    %1802 = vmatpush.bf16.msra.mxu0 %v1199
    %1803 = vmatpush.bf16.msra.mxu0 %v1191
    %1804 = vmatpush.bf16.msra.mxu0 %v1183
    %1805 = vmatmul.bf16.gmra.mxu0 %v341
    %v1806 = vpop.f32.mrf.mxu0
    %v1807 = vadd.f32 %v1794, %v1806
    %v1808 = vpop.f32.mrf.mxu0
    %1809 = vdwg.mxu0
    %1810 = vmatpush.bf16.msra.mxu0 %v1303
    %1811 = vmatpush.bf16.msra.mxu0 %v1295
    %1812 = vmatpush.bf16.msra.mxu0 %v1287
    %1813 = vmatpush.bf16.msra.mxu0 %v1279
    %1814 = vmatpush.bf16.msra.mxu0 %v1271
    %1815 = vmatpush.bf16.msra.mxu0 %v1263
    %1816 = vmatpush.bf16.msra.mxu0 %v1255
    %1817 = vmatpush.bf16.msra.mxu0 %v1247
    %1818 = vmatmul.bf16.gmra.mxu0 %v342
    %v1819 = vpop.f32.mrf.mxu0
    %v1820 = vadd.f32 %v1807, %v1819
    %v1821 = vpop.f32.mrf.mxu0
    %1822 = vdwg.mxu0
    %1823 = vmatpush.bf16.msra.mxu0 %v1367
    %1824 = vmatpush.bf16.msra.mxu0 %v1359
    %1825 = vmatpush.bf16.msra.mxu0 %v1351
    %1826 = vmatpush.bf16.msra.mxu0 %v1343
    %1827 = vmatpush.bf16.msra.mxu0 %v1335
    %1828 = vmatpush.bf16.msra.mxu0 %v1327
    %1829 = vmatpush.bf16.msra.mxu0 %v1319
    %1830 = vmatpush.bf16.msra.mxu0 %v1311
    %1831 = vmatmul.bf16.gmra.mxu0 %v343
    %v1832 = vpop.f32.mrf.mxu0
    %v1833 = vadd.f32 %v1820, %v1832
    %v1834 = vpop.f32.mrf.mxu0
    %1835 = vdwg.mxu0
    %1836 = vmatpush.bf16.msra.mxu0 %v1176
    %1837 = vmatpush.bf16.msra.mxu0 %v1168
    %1838 = vmatpush.bf16.msra.mxu0 %v1160
    %1839 = vmatpush.bf16.msra.mxu0 %v1152
    %1840 = vmatpush.bf16.msra.mxu0 %v1144
    %1841 = vmatpush.bf16.msra.mxu0 %v1136
    %1842 = vmatpush.bf16.msra.mxu0 %v1128
    %1843 = vmatpush.bf16.msra.mxu0 %v1120
    %1844 = vmatmul.bf16.gmra.mxu0 %v340
    %v1845 = vpop.f32.mrf.mxu0
    %v1846 = vadd.f32 %v322, %v1845
    %v1847 = vpop.f32.mrf.mxu0
    %1848 = vdwg.mxu0
    %1849 = vmatpush.bf16.msra.mxu0 %v1240
    %1850 = vmatpush.bf16.msra.mxu0 %v1232
    %1851 = vmatpush.bf16.msra.mxu0 %v1224
    %1852 = vmatpush.bf16.msra.mxu0 %v1216
    %1853 = vmatpush.bf16.msra.mxu0 %v1208
    %1854 = vmatpush.bf16.msra.mxu0 %v1200
    %1855 = vmatpush.bf16.msra.mxu0 %v1192
    %1856 = vmatpush.bf16.msra.mxu0 %v1184
    %1857 = vmatmul.bf16.gmra.mxu0 %v341
    %v1858 = vpop.f32.mrf.mxu0
    %v1859 = vadd.f32 %v1846, %v1858
    %v1860 = vpop.f32.mrf.mxu0
    %1861 = vdwg.mxu0
    %1862 = vmatpush.bf16.msra.mxu0 %v1304
    %1863 = vmatpush.bf16.msra.mxu0 %v1296
    %1864 = vmatpush.bf16.msra.mxu0 %v1288
    %1865 = vmatpush.bf16.msra.mxu0 %v1280
    %1866 = vmatpush.bf16.msra.mxu0 %v1272
    %1867 = vmatpush.bf16.msra.mxu0 %v1264
    %1868 = vmatpush.bf16.msra.mxu0 %v1256
    %1869 = vmatpush.bf16.msra.mxu0 %v1248
    %1870 = vmatmul.bf16.gmra.mxu0 %v342
    %v1871 = vpop.f32.mrf.mxu0
    %v1872 = vadd.f32 %v1859, %v1871
    %v1873 = vpop.f32.mrf.mxu0
    %1874 = vdwg.mxu0
    %1875 = vmatpush.bf16.msra.mxu0 %v1368
    %1876 = vmatpush.bf16.msra.mxu0 %v1360
    %1877 = vmatpush.bf16.msra.mxu0 %v1352
    %1878 = vmatpush.bf16.msra.mxu0 %v1344
    %1879 = vmatpush.bf16.msra.mxu0 %v1336
    %1880 = vmatpush.bf16.msra.mxu0 %v1328
    %1881 = vmatpush.bf16.msra.mxu0 %v1320
    %1882 = vmatpush.bf16.msra.mxu0 %v1312
    %1883 = vmatmul.bf16.gmra.mxu0 %v343
    %v1884 = vpop.f32.mrf.mxu0
    %v1885 = vadd.f32 %v1872, %v1884
    %v1886 = vpop.f32.mrf.mxu0
    %1887 = vdwg.mxu0
    %1888 = vmatpush.bf16.msra.mxu0 %v1177
    %1889 = vmatpush.bf16.msra.mxu0 %v1169
    %1890 = vmatpush.bf16.msra.mxu0 %v1161
    %1891 = vmatpush.bf16.msra.mxu0 %v1153
    %1892 = vmatpush.bf16.msra.mxu0 %v1145
    %1893 = vmatpush.bf16.msra.mxu0 %v1137
    %1894 = vmatpush.bf16.msra.mxu0 %v1129
    %1895 = vmatpush.bf16.msra.mxu0 %v1121
    %1896 = vmatmul.bf16.gmra.mxu0 %v340
    %v1897 = vpop.f32.mrf.mxu0
    %v1898 = vadd.f32 %v323, %v1897
    %v1899 = vpop.f32.mrf.mxu0
    %1900 = vdwg.mxu0
    %1901 = vmatpush.bf16.msra.mxu0 %v1241
    %1902 = vmatpush.bf16.msra.mxu0 %v1233
    %1903 = vmatpush.bf16.msra.mxu0 %v1225
    %1904 = vmatpush.bf16.msra.mxu0 %v1217
    %1905 = vmatpush.bf16.msra.mxu0 %v1209
    %1906 = vmatpush.bf16.msra.mxu0 %v1201
    %1907 = vmatpush.bf16.msra.mxu0 %v1193
    %1908 = vmatpush.bf16.msra.mxu0 %v1185
    %1909 = vmatmul.bf16.gmra.mxu0 %v341
    %v1910 = vpop.f32.mrf.mxu0
    %v1911 = vadd.f32 %v1898, %v1910
    %v1912 = vpop.f32.mrf.mxu0
    %1913 = vdwg.mxu0
    %1914 = vmatpush.bf16.msra.mxu0 %v1305
    %1915 = vmatpush.bf16.msra.mxu0 %v1297
    %1916 = vmatpush.bf16.msra.mxu0 %v1289
    %1917 = vmatpush.bf16.msra.mxu0 %v1281
    %1918 = vmatpush.bf16.msra.mxu0 %v1273
    %1919 = vmatpush.bf16.msra.mxu0 %v1265
    %1920 = vmatpush.bf16.msra.mxu0 %v1257
    %1921 = vmatpush.bf16.msra.mxu0 %v1249
    %1922 = vmatmul.bf16.gmra.mxu0 %v342
    %v1923 = vpop.f32.mrf.mxu0
    %v1924 = vadd.f32 %v1911, %v1923
    %v1925 = vpop.f32.mrf.mxu0
    %1926 = vdwg.mxu0
    %1927 = vmatpush.bf16.msra.mxu0 %v1369
    %1928 = vmatpush.bf16.msra.mxu0 %v1361
    %1929 = vmatpush.bf16.msra.mxu0 %v1353
    %1930 = vmatpush.bf16.msra.mxu0 %v1345
    %1931 = vmatpush.bf16.msra.mxu0 %v1337
    %1932 = vmatpush.bf16.msra.mxu0 %v1329
    %1933 = vmatpush.bf16.msra.mxu0 %v1321
    %1934 = vmatpush.bf16.msra.mxu0 %v1313
    %1935 = vmatmul.bf16.gmra.mxu0 %v343
    %v1936 = vpop.f32.mrf.mxu0
    %v1937 = vadd.f32 %v1924, %v1936
    %v1938 = vpop.f32.mrf.mxu0
    %1939 = vdwg.mxu0
    %1940 = vmatpush.bf16.msra.mxu0 %v1178
    %1941 = vmatpush.bf16.msra.mxu0 %v1170
    %1942 = vmatpush.bf16.msra.mxu0 %v1162
    %1943 = vmatpush.bf16.msra.mxu0 %v1154
    %1944 = vmatpush.bf16.msra.mxu0 %v1146
    %1945 = vmatpush.bf16.msra.mxu0 %v1138
    %1946 = vmatpush.bf16.msra.mxu0 %v1130
    %1947 = vmatpush.bf16.msra.mxu0 %v1122
    %1948 = vmatmul.bf16.gmra.mxu0 %v340
    %v1949 = vpop.f32.mrf.mxu0
    %v1950 = vadd.f32 %v324, %v1949
    %v1951 = vpop.f32.mrf.mxu0
    %1952 = vdwg.mxu0
    %1953 = vmatpush.bf16.msra.mxu0 %v1242
    %1954 = vmatpush.bf16.msra.mxu0 %v1234
    %1955 = vmatpush.bf16.msra.mxu0 %v1226
    %1956 = vmatpush.bf16.msra.mxu0 %v1218
    %1957 = vmatpush.bf16.msra.mxu0 %v1210
    %1958 = vmatpush.bf16.msra.mxu0 %v1202
    %1959 = vmatpush.bf16.msra.mxu0 %v1194
    %1960 = vmatpush.bf16.msra.mxu0 %v1186
    %1961 = vmatmul.bf16.gmra.mxu0 %v341
    %v1962 = vpop.f32.mrf.mxu0
    %v1963 = vadd.f32 %v1950, %v1962
    %v1964 = vpop.f32.mrf.mxu0
    %1965 = vdwg.mxu0
    %1966 = vmatpush.bf16.msra.mxu0 %v1306
    %1967 = vmatpush.bf16.msra.mxu0 %v1298
    %1968 = vmatpush.bf16.msra.mxu0 %v1290
    %1969 = vmatpush.bf16.msra.mxu0 %v1282
    %1970 = vmatpush.bf16.msra.mxu0 %v1274
    %1971 = vmatpush.bf16.msra.mxu0 %v1266
    %1972 = vmatpush.bf16.msra.mxu0 %v1258
    %1973 = vmatpush.bf16.msra.mxu0 %v1250
    %1974 = vmatmul.bf16.gmra.mxu0 %v342
    %v1975 = vpop.f32.mrf.mxu0
    %v1976 = vadd.f32 %v1963, %v1975
    %v1977 = vpop.f32.mrf.mxu0
    %1978 = vdwg.mxu0
    %1979 = vmatpush.bf16.msra.mxu0 %v1370
    %1980 = vmatpush.bf16.msra.mxu0 %v1362
    %1981 = vmatpush.bf16.msra.mxu0 %v1354
    %1982 = vmatpush.bf16.msra.mxu0 %v1346
    %1983 = vmatpush.bf16.msra.mxu0 %v1338
    %1984 = vmatpush.bf16.msra.mxu0 %v1330
    %1985 = vmatpush.bf16.msra.mxu0 %v1322
    %1986 = vmatpush.bf16.msra.mxu0 %v1314
    %1987 = vmatmul.bf16.gmra.mxu0 %v343
    %v1988 = vpop.f32.mrf.mxu0
    %v1989 = vadd.f32 %v1976, %v1988
    %v1990 = vpop.f32.mrf.mxu0
    %1991 = vdwg.mxu0
    %1992 = vmatpush.bf16.msra.mxu0 %v1179
    %1993 = vmatpush.bf16.msra.mxu0 %v1171
    %1994 = vmatpush.bf16.msra.mxu0 %v1163
    %1995 = vmatpush.bf16.msra.mxu0 %v1155
    %1996 = vmatpush.bf16.msra.mxu0 %v1147
    %1997 = vmatpush.bf16.msra.mxu0 %v1139
    %1998 = vmatpush.bf16.msra.mxu0 %v1131
    %1999 = vmatpush.bf16.msra.mxu0 %v1123
    %2000 = vmatmul.bf16.gmra.mxu0 %v340
    %v2001 = vpop.f32.mrf.mxu0
    %v2002 = vadd.f32 %v325, %v2001
    %v2003 = vpop.f32.mrf.mxu0
    %2004 = vdwg.mxu0
    %2005 = vmatpush.bf16.msra.mxu0 %v1243
    %2006 = vmatpush.bf16.msra.mxu0 %v1235
    %2007 = vmatpush.bf16.msra.mxu0 %v1227
    %2008 = vmatpush.bf16.msra.mxu0 %v1219
    %2009 = vmatpush.bf16.msra.mxu0 %v1211
    %2010 = vmatpush.bf16.msra.mxu0 %v1203
    %2011 = vmatpush.bf16.msra.mxu0 %v1195
    %2012 = vmatpush.bf16.msra.mxu0 %v1187
    %2013 = vmatmul.bf16.gmra.mxu0 %v341
    %v2014 = vpop.f32.mrf.mxu0
    %v2015 = vadd.f32 %v2002, %v2014
    %v2016 = vpop.f32.mrf.mxu0
    %2017 = vdwg.mxu0
    %2018 = vmatpush.bf16.msra.mxu0 %v1307
    %2019 = vmatpush.bf16.msra.mxu0 %v1299
    %2020 = vmatpush.bf16.msra.mxu0 %v1291
    %2021 = vmatpush.bf16.msra.mxu0 %v1283
    %2022 = vmatpush.bf16.msra.mxu0 %v1275
    %2023 = vmatpush.bf16.msra.mxu0 %v1267
    %2024 = vmatpush.bf16.msra.mxu0 %v1259
    %2025 = vmatpush.bf16.msra.mxu0 %v1251
    %2026 = vmatmul.bf16.gmra.mxu0 %v342
    %v2027 = vpop.f32.mrf.mxu0
    %v2028 = vadd.f32 %v2015, %v2027
    %v2029 = vpop.f32.mrf.mxu0
    %2030 = vdwg.mxu0
    %2031 = vmatpush.bf16.msra.mxu0 %v1371
    %2032 = vmatpush.bf16.msra.mxu0 %v1363
    %2033 = vmatpush.bf16.msra.mxu0 %v1355
    %2034 = vmatpush.bf16.msra.mxu0 %v1347
    %2035 = vmatpush.bf16.msra.mxu0 %v1339
    %2036 = vmatpush.bf16.msra.mxu0 %v1331
    %2037 = vmatpush.bf16.msra.mxu0 %v1323
    %2038 = vmatpush.bf16.msra.mxu0 %v1315
    %2039 = vmatmul.bf16.gmra.mxu0 %v343
    %v2040 = vpop.f32.mrf.mxu0
    %v2041 = vadd.f32 %v2028, %v2040
    %v2042 = vpop.f32.mrf.mxu0
    %2043 = vdwg.mxu0
    %v2044 = vpack.c.bf16 %v1729, %v1677
    %v2045 = vpack.c.bf16 %v1833, %v1781
    %v2046 = vpack.c.bf16 %v1937, %v1885
    %v2047 = vpack.c.bf16 %v2041, %v1989
    %2048 = vst [vmem:[#allocation8] sm:$0xff] %v2044
    %2049 = vst [vmem:[#allocation8 + $0x8] sm:$0xff] %v2045
    %2050 = vst [vmem:[#allocation8 + $0x10] sm:$0xff] %v2046
    %2051 = vst [vmem:[#allocation8 + $0x18] sm:$0xff] %v2047
    // Predicated region
    $region26: #{_expert_call.1} parent=1 // pred_check
      _
    $region27: #{_expert_call.1} parent=1 // pred_check_branch
      %2053 = sbr.rel (0) target = $region29
    $region28: #{_expert_call.1} parent=1 // pred_region
      %2055 = vsyncadd [#allocation4], 0
      %s2057 = sshll.u32 [#allocation8], 4
      %s2058 = int_to_ptr.vmem [resolvable:$true] %s2057
      %s2059 = sshll.u32 %s3, 4
      %s2060 = int_to_ptr.hbm [resolvable:$true] %s2059
      %2062 = dma.vmem_to_hbm [thread:$0]  %s2058, 512, %s2060, [#allocation4]
    $region29: #{_expert_call.1} parent=1 // pred_fallthru
      _
    // Predicated region
    $region30: #{_expert_call.1} parent=1 // pred_check
      _
    $region31: #{_expert_call.1} parent=1 // pred_check_branch
      %2064 = sbr.rel (0) target = $region33
    $region32: #{_expert_call.1} parent=1 // pred_region
      %2066 = dma.done [#allocation4], 512
    $region33: #{_expert_call.1} parent=1 // pred_fallthru
      _
    %2067 = vsyncpa [#allocation3], 1
    %2068 = vsyncpa [#allocation6], 1
    %2069 = vsyncpa [#allocation4], 1

</llo_original>
